<compile_context>
chip_gen: v7x
topology: tpu7x:2x2x1
jax: 0.10.0
libtpu: 0.0.40
codegen_flags: <defaults>
</compile_context>

<pallas_src>
import functools

import jax
import jax.numpy as jnp
from jax.experimental import pallas as pl
from jax.experimental.pallas import tpu as pltpu


# ------------------------------- kernel -------------------------------------

def _residual_block_kernel(x_ref, w_ref, p_ref, sel_ref, m_ref, out_ref, *,
                           N, H, W, C, conv_dtype, eps=1e-5):
    NH = N * H
    inv_m = 1.0 / float(N * H * W)   # elements per channel for BN stats

    x = x_ref[...]                    # (NH, WC) f32, lane-dense
    sel = sel_ref[...]                # (WC, WC) channel-broadcast selector
    not_first = m_ref[0]              # (NH, WC): 0 where h == 0, else 1
    not_last = m_ref[1]               # (NH, WC): 0 where h == H-1, else 1

    h = x
    for layer in range(3):
        bias = p_ref[3 * layer + 0:3 * layer + 1, :]     # (1, WC)
        gamma = p_ref[3 * layer + 1:3 * layer + 2, :]    # (1, WC)
        beta = p_ref[3 * layer + 2:3 * layer + 3, :]     # (1, WC)

        # ---- Conv2d (3,1), stride 1, padding 'same': 3 accumulated matmuls --
        h_m1 = pltpu.roll(h, shift=1, axis=0) * not_first       # x[h-1]
        h_p1 = pltpu.roll(h, shift=NH - 1, axis=0) * not_last   # x[h+1]

        def tap_dot(a, tap, _layer=layer):
            return jnp.dot(a.astype(conv_dtype), w_ref[3 * _layer + tap],
                           preferred_element_type=jnp.float32)

        y = tap_dot(h_m1, 0) + tap_dot(h, 1) + tap_dot(h_p1, 2) + bias

        # ---- LeakyReLU(0.01): one vmul + vmax -------------------------------
        y = jnp.maximum(y, 0.01 * y)

        # ---- BatchNorm2d (training-mode batch stats, centered variance) -----
        s1 = jnp.sum(y, axis=0, keepdims=True)                       # (1, WC)
        mean = jnp.dot(s1, sel, preferred_element_type=jnp.float32) * inv_m
        d = y - mean
        s2 = jnp.sum(d * d, axis=0, keepdims=True)                   # (1, WC)
        var = jnp.dot(s2, sel, preferred_element_type=jnp.float32) * inv_m
        scale = gamma * jax.lax.rsqrt(var + eps)
        shift = beta - mean * scale
        h = y * scale + shift                            # single FMA per element

    # Residual add + ReLU, full-lane unmasked store.
    out_ref[...] = jnp.maximum(h + x, 0.0)


# ------------------------------- wrapper ------------------------------------

def _pack_params(params, W, conv_dtype):
    """Pack per-layer (w (3,Cin,Cout), b (1,C), gamma (1,C), beta (1,C)) into
    w_all (9, W*C, W*C) per-tap block-diagonal weights and p_all (9, W*C)."""
    eye_w = jnp.eye(W, dtype=jnp.float32)
    w_blocks, vec_rows = [], []
    for (w, b, g, bt) in params:
        for k in range(3):
            w_blocks.append(jnp.kron(eye_w, w[k]))        # (W*C, W*C)
        vec_rows.append(jnp.tile(b, (1, W))[0])
        vec_rows.append(jnp.tile(g, (1, W))[0])
        vec_rows.append(jnp.tile(bt, (1, W))[0])
    w_all = jnp.stack(w_blocks, axis=0).astype(conv_dtype)   # (9, WC, WC)
    p_all = jnp.stack(vec_rows, axis=0)                      # (9, WC) f32
    return w_all, p_all


@functools.partial(jax.jit, static_argnames=("conv_dtype",))
def residual_block(x_nchw, params, *, conv_dtype=jnp.float32):
    """x_nchw: (N, C, H, W) float32.  Returns (N, C, H, W) float32."""
    N, C, H, W = x_nchw.shape
    NH, WC = N * H, W * C

    # Single relayout each way: NCHW -> lane-dense (N*H, W*C) slab.
    x2 = jnp.transpose(x_nchw, (0, 2, 3, 1)).reshape(NH, WC)
    w_all, p_all = _pack_params(params, W, conv_dtype)

    # Precomputed constants passed to the kernel (review: no in-kernel iota).
    lane_c = jnp.arange(WC, dtype=jnp.int32) % C
    sel = (lane_c[:, None] == lane_c[None, :]).astype(jnp.float32)   # (WC, WC)
    h_idx = jnp.arange(NH, dtype=jnp.int32) % H
    nf = jnp.broadcast_to((h_idx != 0).astype(jnp.float32)[:, None], (NH, WC))
    nl = jnp.broadcast_to((h_idx != H - 1).astype(jnp.float32)[:, None], (NH, WC))
    masks = jnp.stack([nf, nl], axis=0)                               # (2, NH, WC)

    kernel = functools.partial(_residual_block_kernel, N=N, H=H, W=W, C=C,
                               conv_dtype=conv_dtype)

    out2 = pl.pallas_call(
        kernel,
        out_shape=jax.ShapeDtypeStruct((NH, WC), jnp.float32),
        grid=(1,),
        in_specs=[
            pl.BlockSpec((NH, WC), lambda i: (0, 0)),
            pl.BlockSpec(w_all.shape, lambda i: (0, 0, 0)),
            pl.BlockSpec(p_all.shape, lambda i: (0, 0)),
            pl.BlockSpec(sel.shape, lambda i: (0, 0)),
            pl.BlockSpec(masks.shape, lambda i: (0, 0, 0)),
        ],
        out_specs=pl.BlockSpec((NH, WC), lambda i: (0, 0)),
        compiler_params=pltpu.CompilerParams(
            dimension_semantics=("arbitrary",),
            vmem_limit_bytes=32 * 1024 * 1024),
    )(x2, w_all, p_all, sel, masks)

    return jnp.transpose(out2.reshape(N, H, W, C), (0, 3, 1, 2))


# --------------------------- pure-JAX reference ------------------------------

def _conv_h3_ref(x, w, b):
    N, H, W, Ci = x.shape
    Co = w.shape[2]
    zrow = jnp.zeros((N, 1, W, Ci), x.dtype)
    x_m1 = jnp.concatenate([zrow, x[:, :H - 1]], axis=1)
    x_p1 = jnp.concatenate([x[:, 1:], zrow], axis=1)

    def mm(a, wk):
        return jnp.dot(a.reshape(-1, Ci), wk, preferred_element_type=jnp.float32)

    y = mm(x_m1, w[0]) + mm(x, w[1]) + mm(x_p1, w[2]) + b
    return y.reshape(N, H, W, Co)


def _bn_ref(x, gamma, beta, eps=1e-5):
    N, H, W, C = x.shape
    xf = x.reshape(-1, C)
    m = jnp.mean(xf, axis=0, keepdims=True)
    v = jnp.mean((xf - m) ** 2, axis=0, keepdims=True)
    return ((xf - m) * jax.lax.rsqrt(v + eps) * gamma + beta).reshape(N, H, W, C)


def _reference(x_nchw, params):
    x = jnp.transpose(x_nchw, (0, 2, 3, 1)).astype(jnp.float32)
    h = x
    for (w, b, g, bt) in params:
        h = _conv_h3_ref(h, w, b)
        h = jnp.where(h > 0, h, 0.01 * h)
        h = _bn_ref(h, g, bt)
    return jnp.transpose(jnp.maximum(h + x, 0.0), (0, 3, 1, 2))


# --------------------------------- main --------------------------------------

if __name__ == "__main__":
    N, C, H, W = 2, 8, 16, 16   # inchannel == outchannel (identity shortcut)

    key = jax.random.PRNGKey(0)
    keys = jax.random.split(key, 13)

    def make_layer(k):
        kw, kb, kg, kbt = jax.random.split(k, 4)
        w = 0.1 * jax.random.normal(kw, (3, C, C), jnp.float32)   # (kH, Cin, Cout)
        b = 0.1 * jax.random.normal(kb, (1, C), jnp.float32)
        gamma = 1.0 + 0.1 * jax.random.normal(kg, (1, C), jnp.float32)
        beta = 0.1 * jax.random.normal(kbt, (1, C), jnp.float32)
        return (w, b, gamma, beta)

    params = [make_layer(keys[i]) for i in range(3)]
    x = jax.random.normal(keys[12], (N, C, H, W), jnp.float32)

    out = jax.block_until_ready(residual_block(x, params))
    ref = _reference(x, params)

    assert out.shape == (N, C, H, W)
    assert bool(jnp.all(jnp.isfinite(out)))
    assert bool(jnp.allclose(out, ref, rtol=1e-3, atol=1e-3))

    print("KERNEL_OK")
</pallas_src>

<mosaic_0001>
module attributes {stable_mosaic.version = 11 : i64} {
  func.func @_residual_block_kernel(%arg0: i32, %arg1: memref<32x128xf32, #tpu.memory_space<vmem>>, %arg2: memref<9x128x128xf32, #tpu.memory_space<vmem>>, %arg3: memref<9x128xf32, #tpu.memory_space<vmem>>, %arg4: memref<128x128xf32, #tpu.memory_space<vmem>>, %arg5: memref<2x32x128xf32, #tpu.memory_space<vmem>>, %arg6: memref<32x128xf32, #tpu.memory_space<vmem>>) attributes {dimension_semantics = [#tpu.dimension_semantics<arbitrary>], iteration_bounds = array<i64: 1>, scalar_prefetch = 0 : i64, scratch_operands = 0 : i64, tpu.core_type = #tpu.core_type<tc>, window_params = [{pipeline_mode = #tpu.pipeline_mode<synchronous>, transform_indices = @transform_0, window_bounds = array<i64: 32, 128>}, {pipeline_mode = #tpu.pipeline_mode<synchronous>, transform_indices = @transform_1, window_bounds = array<i64: 9, 128, 128>}, {pipeline_mode = #tpu.pipeline_mode<synchronous>, transform_indices = @transform_2, window_bounds = array<i64: 9, 128>}, {pipeline_mode = #tpu.pipeline_mode<synchronous>, transform_indices = @transform_3, window_bounds = array<i64: 128, 128>}, {pipeline_mode = #tpu.pipeline_mode<synchronous>, transform_indices = @transform_4, window_bounds = array<i64: 2, 32, 128>}, {pipeline_mode = #tpu.pipeline_mode<synchronous>, transform_indices = @transform_5, window_bounds = array<i64: 32, 128>}]} {
    %c0 = arith.constant 0 : index
    %c0_0 = arith.constant 0 : index
    %0 = vector.load %arg1[%c0, %c0_0] : memref<32x128xf32, #tpu.memory_space<vmem>>, vector<32x128xf32>
    %c0_1 = arith.constant 0 : index
    %c0_2 = arith.constant 0 : index
    %1 = vector.load %arg4[%c0_1, %c0_2] : memref<128x128xf32, #tpu.memory_space<vmem>>, vector<128x128xf32>
    %c0_3 = arith.constant 0 : index
    %c0_4 = arith.constant 0 : index
    %c0_5 = arith.constant 0 : index
    %2 = vector.load %arg5[%c0_3, %c0_4, %c0_5] : memref<2x32x128xf32, #tpu.memory_space<vmem>>, vector<1x32x128xf32>
    %3 = vector.shape_cast %2 : vector<1x32x128xf32> to vector<32x128xf32>
    %c1 = arith.constant 1 : index
    %c0_6 = arith.constant 0 : index
    %c0_7 = arith.constant 0 : index
    %4 = vector.load %arg5[%c1, %c0_6, %c0_7] : memref<2x32x128xf32, #tpu.memory_space<vmem>>, vector<1x32x128xf32>
    %5 = vector.shape_cast %4 : vector<1x32x128xf32> to vector<32x128xf32>
    %c0_8 = arith.constant 0 : index
    %c0_9 = arith.constant 0 : index
    %6 = vector.load %arg3[%c0_8, %c0_9] : memref<9x128xf32, #tpu.memory_space<vmem>>, vector<1x128xf32>
    %c1_10 = arith.constant 1 : index
    %c0_11 = arith.constant 0 : index
    %7 = vector.load %arg3[%c1_10, %c0_11] : memref<9x128xf32, #tpu.memory_space<vmem>>, vector<1x128xf32>
    %c2 = arith.constant 2 : index
    %c0_12 = arith.constant 0 : index
    %8 = vector.load %arg3[%c2, %c0_12] : memref<9x128xf32, #tpu.memory_space<vmem>>, vector<1x128xf32>
    %c1_i32 = arith.constant 1 : i32
    %9 = tpu.dynamic_rotate %0 by %c1_i32 dim 0 : vector<32x128xf32>, i32 -> vector<32x128xf32>
    %10 = arith.mulf %9, %3 : vector<32x128xf32>
    %c31_i32 = arith.constant 31 : i32
    %11 = tpu.dynamic_rotate %0 by %c31_i32 dim 0 : vector<32x128xf32>, i32 -> vector<32x128xf32>
    %12 = arith.mulf %11, %5 : vector<32x128xf32>
    %c0_13 = arith.constant 0 : index
    %c0_14 = arith.constant 0 : index
    %c0_15 = arith.constant 0 : index
    %13 = vector.load %arg2[%c0_13, %c0_14, %c0_15] : memref<9x128x128xf32, #tpu.memory_space<vmem>>, vector<1x128x128xf32>
    %14 = vector.shape_cast %13 : vector<1x128x128xf32> to vector<128x128xf32>
    %cst = arith.constant dense<0.000000e+00> : vector<32x128xf32>
    %15 = tpu.matmul %10, %14, %cst {dimension_numbers = #tpu.dot_dimension_numbers<[1], [0], [0], [1], [0, 0, 1, 1], [], []>} : vector<32x128xf32>, vector<128x128xf32>, vector<32x128xf32> -> vector<32x128xf32>
    %c1_16 = arith.constant 1 : index
    %c0_17 = arith.constant 0 : index
    %c0_18 = arith.constant 0 : index
    %16 = vector.load %arg2[%c1_16, %c0_17, %c0_18] : memref<9x128x128xf32, #tpu.memory_space<vmem>>, vector<1x128x128xf32>
    %17 = vector.shape_cast %16 : vector<1x128x128xf32> to vector<128x128xf32>
    %cst_19 = arith.constant dense<0.000000e+00> : vector<32x128xf32>
    %18 = tpu.matmul %0, %17, %cst_19 {dimension_numbers = #tpu.dot_dimension_numbers<[1], [0], [0], [1], [0, 0, 1, 1], [], []>} : vector<32x128xf32>, vector<128x128xf32>, vector<32x128xf32> -> vector<32x128xf32>
    %19 = arith.addf %15, %18 : vector<32x128xf32>
    %c2_20 = arith.constant 2 : index
    %c0_21 = arith.constant 0 : index
    %c0_22 = arith.constant 0 : index
    %20 = vector.load %arg2[%c2_20, %c0_21, %c0_22] : memref<9x128x128xf32, #tpu.memory_space<vmem>>, vector<1x128x128xf32>
    %21 = vector.shape_cast %20 : vector<1x128x128xf32> to vector<128x128xf32>
    %cst_23 = arith.constant dense<0.000000e+00> : vector<32x128xf32>
    %22 = tpu.matmul %12, %21, %cst_23 {dimension_numbers = #tpu.dot_dimension_numbers<[1], [0], [0], [1], [0, 0, 1, 1], [], []>} : vector<32x128xf32>, vector<128x128xf32>, vector<32x128xf32> -> vector<32x128xf32>
    %23 = arith.addf %19, %22 : vector<32x128xf32>
    %24 = vector.broadcast %6 : vector<1x128xf32> to vector<32x128xf32>
    %25 = arith.addf %23, %24 : vector<32x128xf32>
    %cst_24 = arith.constant 0.00999999977 : f32
    %26 = vector.broadcast %cst_24 : f32 to vector<32x128xf32>
    %27 = arith.mulf %26, %25 : vector<32x128xf32>
    %28 = arith.maximumf %25, %27 : vector<32x128xf32>
    %cst_25 = arith.constant dense<0.000000e+00> : vector<128xf32>
    %29 = vector.multi_reduction <add>, %28, %cst_25 [0] : vector<32x128xf32> to vector<128xf32>
    %30 = vector.shape_cast %29 : vector<128xf32> to vector<1x128xf32>
    %cst_26 = arith.constant dense<0.000000e+00> : vector<1x128xf32>
    %31 = tpu.matmul %30, %1, %cst_26 {dimension_numbers = #tpu.dot_dimension_numbers<[1], [0], [0], [1], [0, 0, 1, 1], [], []>} : vector<1x128xf32>, vector<128x128xf32>, vector<1x128xf32> -> vector<1x128xf32>
    %cst_27 = arith.constant 0.001953125 : f32
    %32 = vector.broadcast %cst_27 : f32 to vector<1x128xf32>
    %33 = arith.mulf %31, %32 : vector<1x128xf32>
    %34 = vector.broadcast %33 : vector<1x128xf32> to vector<32x128xf32>
    %35 = arith.subf %28, %34 : vector<32x128xf32>
    %36 = arith.mulf %35, %35 : vector<32x128xf32>
    %cst_28 = arith.constant dense<0.000000e+00> : vector<128xf32>
    %37 = vector.multi_reduction <add>, %36, %cst_28 [0] : vector<32x128xf32> to vector<128xf32>
    %38 = vector.shape_cast %37 : vector<128xf32> to vector<1x128xf32>
    %cst_29 = arith.constant dense<0.000000e+00> : vector<1x128xf32>
    %39 = tpu.matmul %38, %1, %cst_29 {dimension_numbers = #tpu.dot_dimension_numbers<[1], [0], [0], [1], [0, 0, 1, 1], [], []>} : vector<1x128xf32>, vector<128x128xf32>, vector<1x128xf32> -> vector<1x128xf32>
    %cst_30 = arith.constant 0.001953125 : f32
    %40 = vector.broadcast %cst_30 : f32 to vector<1x128xf32>
    %41 = arith.mulf %39, %40 : vector<1x128xf32>
    %cst_31 = arith.constant 9.99999974E-6 : f32
    %42 = vector.broadcast %cst_31 : f32 to vector<1x128xf32>
    %43 = arith.addf %41, %42 : vector<1x128xf32>
    %44 = math.rsqrt %43 : vector<1x128xf32>
    %45 = arith.mulf %7, %44 : vector<1x128xf32>
    %46 = arith.mulf %33, %45 : vector<1x128xf32>
    %47 = arith.subf %8, %46 : vector<1x128xf32>
    %48 = vector.broadcast %45 : vector<1x128xf32> to vector<32x128xf32>
    %49 = arith.mulf %28, %48 : vector<32x128xf32>
    %50 = vector.broadcast %47 : vector<1x128xf32> to vector<32x128xf32>
    %51 = arith.addf %49, %50 : vector<32x128xf32>
    %c3 = arith.constant 3 : index
    %c0_32 = arith.constant 0 : index
    %52 = vector.load %arg3[%c3, %c0_32] : memref<9x128xf32, #tpu.memory_space<vmem>>, vector<1x128xf32>
    %c4 = arith.constant 4 : index
    %c0_33 = arith.constant 0 : index
    %53 = vector.load %arg3[%c4, %c0_33] : memref<9x128xf32, #tpu.memory_space<vmem>>, vector<1x128xf32>
    %c5 = arith.constant 5 : index
    %c0_34 = arith.constant 0 : index
    %54 = vector.load %arg3[%c5, %c0_34] : memref<9x128xf32, #tpu.memory_space<vmem>>, vector<1x128xf32>
    %c1_i32_35 = arith.constant 1 : i32
    %55 = tpu.dynamic_rotate %51 by %c1_i32_35 dim 0 : vector<32x128xf32>, i32 -> vector<32x128xf32>
    %56 = arith.mulf %55, %3 : vector<32x128xf32>
    %c31_i32_36 = arith.constant 31 : i32
    %57 = tpu.dynamic_rotate %51 by %c31_i32_36 dim 0 : vector<32x128xf32>, i32 -> vector<32x128xf32>
    %58 = arith.mulf %57, %5 : vector<32x128xf32>
    %c3_37 = arith.constant 3 : index
    %c0_38 = arith.constant 0 : index
    %c0_39 = arith.constant 0 : index
    %59 = vector.load %arg2[%c3_37, %c0_38, %c0_39] : memref<9x128x128xf32, #tpu.memory_space<vmem>>, vector<1x128x128xf32>
    %60 = vector.shape_cast %59 : vector<1x128x128xf32> to vector<128x128xf32>
    %cst_40 = arith.constant dense<0.000000e+00> : vector<32x128xf32>
    %61 = tpu.matmul %56, %60, %cst_40 {dimension_numbers = #tpu.dot_dimension_numbers<[1], [0], [0], [1], [0, 0, 1, 1], [], []>} : vector<32x128xf32>, vector<128x128xf32>, vector<32x128xf32> -> vector<32x128xf32>
    %c4_41 = arith.constant 4 : index
    %c0_42 = arith.constant 0 : index
    %c0_43 = arith.constant 0 : index
    %62 = vector.load %arg2[%c4_41, %c0_42, %c0_43] : memref<9x128x128xf32, #tpu.memory_space<vmem>>, vector<1x128x128xf32>
    %63 = vector.shape_cast %62 : vector<1x128x128xf32> to vector<128x128xf32>
    %cst_44 = arith.constant dense<0.000000e+00> : vector<32x128xf32>
    %64 = tpu.matmul %51, %63, %cst_44 {dimension_numbers = #tpu.dot_dimension_numbers<[1], [0], [0], [1], [0, 0, 1, 1], [], []>} : vector<32x128xf32>, vector<128x128xf32>, vector<32x128xf32> -> vector<32x128xf32>
    %65 = arith.addf %61, %64 : vector<32x128xf32>
    %c5_45 = arith.constant 5 : index
    %c0_46 = arith.constant 0 : index
    %c0_47 = arith.constant 0 : index
    %66 = vector.load %arg2[%c5_45, %c0_46, %c0_47] : memref<9x128x128xf32, #tpu.memory_space<vmem>>, vector<1x128x128xf32>
    %67 = vector.shape_cast %66 : vector<1x128x128xf32> to vector<128x128xf32>
    %cst_48 = arith.constant dense<0.000000e+00> : vector<32x128xf32>
    %68 = tpu.matmul %58, %67, %cst_48 {dimension_numbers = #tpu.dot_dimension_numbers<[1], [0], [0], [1], [0, 0, 1, 1], [], []>} : vector<32x128xf32>, vector<128x128xf32>, vector<32x128xf32> -> vector<32x128xf32>
    %69 = arith.addf %65, %68 : vector<32x128xf32>
    %70 = vector.broadcast %52 : vector<1x128xf32> to vector<32x128xf32>
    %71 = arith.addf %69, %70 : vector<32x128xf32>
    %cst_49 = arith.constant 0.00999999977 : f32
    %72 = vector.broadcast %cst_49 : f32 to vector<32x128xf32>
    %73 = arith.mulf %72, %71 : vector<32x128xf32>
    %74 = arith.maximumf %71, %73 : vector<32x128xf32>
    %cst_50 = arith.constant dense<0.000000e+00> : vector<128xf32>
    %75 = vector.multi_reduction <add>, %74, %cst_50 [0] : vector<32x128xf32> to vector<128xf32>
    %76 = vector.shape_cast %75 : vector<128xf32> to vector<1x128xf32>
    %cst_51 = arith.constant dense<0.000000e+00> : vector<1x128xf32>
    %77 = tpu.matmul %76, %1, %cst_51 {dimension_numbers = #tpu.dot_dimension_numbers<[1], [0], [0], [1], [0, 0, 1, 1], [], []>} : vector<1x128xf32>, vector<128x128xf32>, vector<1x128xf32> -> vector<1x128xf32>
    %cst_52 = arith.constant 0.001953125 : f32
    %78 = vector.broadcast %cst_52 : f32 to vector<1x128xf32>
    %79 = arith.mulf %77, %78 : vector<1x128xf32>
    %80 = vector.broadcast %79 : vector<1x128xf32> to vector<32x128xf32>
    %81 = arith.subf %74, %80 : vector<32x128xf32>
    %82 = arith.mulf %81, %81 : vector<32x128xf32>
    %cst_53 = arith.constant dense<0.000000e+00> : vector<128xf32>
    %83 = vector.multi_reduction <add>, %82, %cst_53 [0] : vector<32x128xf32> to vector<128xf32>
    %84 = vector.shape_cast %83 : vector<128xf32> to vector<1x128xf32>
    %cst_54 = arith.constant dense<0.000000e+00> : vector<1x128xf32>
    %85 = tpu.matmul %84, %1, %cst_54 {dimension_numbers = #tpu.dot_dimension_numbers<[1], [0], [0], [1], [0, 0, 1, 1], [], []>} : vector<1x128xf32>, vector<128x128xf32>, vector<1x128xf32> -> vector<1x128xf32>
    %cst_55 = arith.constant 0.001953125 : f32
    %86 = vector.broadcast %cst_55 : f32 to vector<1x128xf32>
    %87 = arith.mulf %85, %86 : vector<1x128xf32>
    %cst_56 = arith.constant 9.99999974E-6 : f32
    %88 = vector.broadcast %cst_56 : f32 to vector<1x128xf32>
    %89 = arith.addf %87, %88 : vector<1x128xf32>
    %90 = math.rsqrt %89 : vector<1x128xf32>
    %91 = arith.mulf %53, %90 : vector<1x128xf32>
    %92 = arith.mulf %79, %91 : vector<1x128xf32>
    %93 = arith.subf %54, %92 : vector<1x128xf32>
    %94 = vector.broadcast %91 : vector<1x128xf32> to vector<32x128xf32>
    %95 = arith.mulf %74, %94 : vector<32x128xf32>
    %96 = vector.broadcast %93 : vector<1x128xf32> to vector<32x128xf32>
    %97 = arith.addf %95, %96 : vector<32x128xf32>
    %c6 = arith.constant 6 : index
    %c0_57 = arith.constant 0 : index
    %98 = vector.load %arg3[%c6, %c0_57] : memref<9x128xf32, #tpu.memory_space<vmem>>, vector<1x128xf32>
    %c7 = arith.constant 7 : index
    %c0_58 = arith.constant 0 : index
    %99 = vector.load %arg3[%c7, %c0_58] : memref<9x128xf32, #tpu.memory_space<vmem>>, vector<1x128xf32>
    %c8 = arith.constant 8 : index
    %c0_59 = arith.constant 0 : index
    %100 = vector.load %arg3[%c8, %c0_59] : memref<9x128xf32, #tpu.memory_space<vmem>>, vector<1x128xf32>
    %c1_i32_60 = arith.constant 1 : i32
    %101 = tpu.dynamic_rotate %97 by %c1_i32_60 dim 0 : vector<32x128xf32>, i32 -> vector<32x128xf32>
    %102 = arith.mulf %101, %3 : vector<32x128xf32>
    %c31_i32_61 = arith.constant 31 : i32
    %103 = tpu.dynamic_rotate %97 by %c31_i32_61 dim 0 : vector<32x128xf32>, i32 -> vector<32x128xf32>
    %104 = arith.mulf %103, %5 : vector<32x128xf32>
    %c6_62 = arith.constant 6 : index
    %c0_63 = arith.constant 0 : index
    %c0_64 = arith.constant 0 : index
    %105 = vector.load %arg2[%c6_62, %c0_63, %c0_64] : memref<9x128x128xf32, #tpu.memory_space<vmem>>, vector<1x128x128xf32>
    %106 = vector.shape_cast %105 : vector<1x128x128xf32> to vector<128x128xf32>
    %cst_65 = arith.constant dense<0.000000e+00> : vector<32x128xf32>
    %107 = tpu.matmul %102, %106, %cst_65 {dimension_numbers = #tpu.dot_dimension_numbers<[1], [0], [0], [1], [0, 0, 1, 1], [], []>} : vector<32x128xf32>, vector<128x128xf32>, vector<32x128xf32> -> vector<32x128xf32>
    %c7_66 = arith.constant 7 : index
    %c0_67 = arith.constant 0 : index
    %c0_68 = arith.constant 0 : index
    %108 = vector.load %arg2[%c7_66, %c0_67, %c0_68] : memref<9x128x128xf32, #tpu.memory_space<vmem>>, vector<1x128x128xf32>
    %109 = vector.shape_cast %108 : vector<1x128x128xf32> to vector<128x128xf32>
    %cst_69 = arith.constant dense<0.000000e+00> : vector<32x128xf32>
    %110 = tpu.matmul %97, %109, %cst_69 {dimension_numbers = #tpu.dot_dimension_numbers<[1], [0], [0], [1], [0, 0, 1, 1], [], []>} : vector<32x128xf32>, vector<128x128xf32>, vector<32x128xf32> -> vector<32x128xf32>
    %111 = arith.addf %107, %110 : vector<32x128xf32>
    %c8_70 = arith.constant 8 : index
    %c0_71 = arith.constant 0 : index
    %c0_72 = arith.constant 0 : index
    %112 = vector.load %arg2[%c8_70, %c0_71, %c0_72] : memref<9x128x128xf32, #tpu.memory_space<vmem>>, vector<1x128x128xf32>
    %113 = vector.shape_cast %112 : vector<1x128x128xf32> to vector<128x128xf32>
    %cst_73 = arith.constant dense<0.000000e+00> : vector<32x128xf32>
    %114 = tpu.matmul %104, %113, %cst_73 {dimension_numbers = #tpu.dot_dimension_numbers<[1], [0], [0], [1], [0, 0, 1, 1], [], []>} : vector<32x128xf32>, vector<128x128xf32>, vector<32x128xf32> -> vector<32x128xf32>
    %115 = arith.addf %111, %114 : vector<32x128xf32>
    %116 = vector.broadcast %98 : vector<1x128xf32> to vector<32x128xf32>
    %117 = arith.addf %115, %116 : vector<32x128xf32>
    %cst_74 = arith.constant 0.00999999977 : f32
    %118 = vector.broadcast %cst_74 : f32 to vector<32x128xf32>
    %119 = arith.mulf %118, %117 : vector<32x128xf32>
    %120 = arith.maximumf %117, %119 : vector<32x128xf32>
    %cst_75 = arith.constant dense<0.000000e+00> : vector<128xf32>
    %121 = vector.multi_reduction <add>, %120, %cst_75 [0] : vector<32x128xf32> to vector<128xf32>
    %122 = vector.shape_cast %121 : vector<128xf32> to vector<1x128xf32>
    %cst_76 = arith.constant dense<0.000000e+00> : vector<1x128xf32>
    %123 = tpu.matmul %122, %1, %cst_76 {dimension_numbers = #tpu.dot_dimension_numbers<[1], [0], [0], [1], [0, 0, 1, 1], [], []>} : vector<1x128xf32>, vector<128x128xf32>, vector<1x128xf32> -> vector<1x128xf32>
    %cst_77 = arith.constant 0.001953125 : f32
    %124 = vector.broadcast %cst_77 : f32 to vector<1x128xf32>
    %125 = arith.mulf %123, %124 : vector<1x128xf32>
    %126 = vector.broadcast %125 : vector<1x128xf32> to vector<32x128xf32>
    %127 = arith.subf %120, %126 : vector<32x128xf32>
    %128 = arith.mulf %127, %127 : vector<32x128xf32>
    %cst_78 = arith.constant dense<0.000000e+00> : vector<128xf32>
    %129 = vector.multi_reduction <add>, %128, %cst_78 [0] : vector<32x128xf32> to vector<128xf32>
    %130 = vector.shape_cast %129 : vector<128xf32> to vector<1x128xf32>
    %cst_79 = arith.constant dense<0.000000e+00> : vector<1x128xf32>
    %131 = tpu.matmul %130, %1, %cst_79 {dimension_numbers = #tpu.dot_dimension_numbers<[1], [0], [0], [1], [0, 0, 1, 1], [], []>} : vector<1x128xf32>, vector<128x128xf32>, vector<1x128xf32> -> vector<1x128xf32>
    %cst_80 = arith.constant 0.001953125 : f32
    %132 = vector.broadcast %cst_80 : f32 to vector<1x128xf32>
    %133 = arith.mulf %131, %132 : vector<1x128xf32>
    %cst_81 = arith.constant 9.99999974E-6 : f32
    %134 = vector.broadcast %cst_81 : f32 to vector<1x128xf32>
    %135 = arith.addf %133, %134 : vector<1x128xf32>
    %136 = math.rsqrt %135 : vector<1x128xf32>
    %137 = arith.mulf %99, %136 : vector<1x128xf32>
    %138 = arith.mulf %125, %137 : vector<1x128xf32>
    %139 = arith.subf %100, %138 : vector<1x128xf32>
    %140 = vector.broadcast %137 : vector<1x128xf32> to vector<32x128xf32>
    %141 = arith.mulf %120, %140 : vector<32x128xf32>
    %142 = vector.broadcast %139 : vector<1x128xf32> to vector<32x128xf32>
    %143 = arith.addf %141, %142 : vector<32x128xf32>
    %144 = arith.addf %143, %0 : vector<32x128xf32>
    %cst_82 = arith.constant 0.000000e+00 : f32
    %145 = vector.broadcast %cst_82 : f32 to vector<32x128xf32>
    %146 = arith.maximumf %144, %145 : vector<32x128xf32>
    %c0_83 = arith.constant 0 : index
    %c0_84 = arith.constant 0 : index
    %147 = vector.load %arg6[%c0_83, %c0_84] : memref<32x128xf32, #tpu.memory_space<vmem>>, vector<32x128xf32>
    tpu.vector_store %arg6[%c0_83, %c0_84], %146 {strides = array<i32>} : memref<32x128xf32, #tpu.memory_space<vmem>>, vector<32x128xf32>,
    return
  }
  func.func @transform_0(%arg0: i32) -> (i32, i32) {
    %c0_i32 = arith.constant 0 : i32
    %c0_i32_0 = arith.constant 0 : i32
    %c0_i32_1 = arith.constant 0 : i32
    return %c0_i32, %c0_i32_0 : i32, i32
  }
  func.func @transform_1(%arg0: i32) -> (i32, i32, i32) {
    %c0_i32 = arith.constant 0 : i32
    %c0_i32_0 = arith.constant 0 : i32
    %c0_i32_1 = arith.constant 0 : i32
    %c0_i32_2 = arith.constant 0 : i32
    return %c0_i32, %c0_i32_0, %c0_i32_1 : i32, i32, i32
  }
  func.func @transform_2(%arg0: i32) -> (i32, i32) {
    %c0_i32 = arith.constant 0 : i32
    %c0_i32_0 = arith.constant 0 : i32
    %c0_i32_1 = arith.constant 0 : i32
    return %c0_i32, %c0_i32_0 : i32, i32
  }
  func.func @transform_3(%arg0: i32) -> (i32, i32) {
    %c0_i32 = arith.constant 0 : i32
    %c0_i32_0 = arith.constant 0 : i32
    %c0_i32_1 = arith.constant 0 : i32
    return %c0_i32, %c0_i32_0 : i32, i32
  }
  func.func @transform_4(%arg0: i32) -> (i32, i32, i32) {
    %c0_i32 = arith.constant 0 : i32
    %c0_i32_0 = arith.constant 0 : i32
    %c0_i32_1 = arith.constant 0 : i32
    %c0_i32_2 = arith.constant 0 : i32
    return %c0_i32, %c0_i32_0, %c0_i32_1 : i32, i32, i32
  }
  func.func @transform_5(%arg0: i32) -> (i32, i32) {
    %c0_i32 = arith.constant 0 : i32
    %c0_i32_0 = arith.constant 0 : i32
    %c0_i32_1 = arith.constant 0 : i32
    return %c0_i32, %c0_i32_0 : i32, i32
  }
}

</mosaic_0001>

<llo_original>
// kernel: residual_block.1
$region0: #{residual_block.1}
  #allocation0 [shape = 'u32[]', space=smem, size = 0x4, offset = 0x4, fixed_abs, tag = 'smem constant byte address 0x4 - core index']
  #allocation1 [shape = 'u32[144,128]{1,0:T(1,128)}', space=vmem, size = 0x12000, scoped, tag = 'internal scratch']
  %s0 = inlined_call_operand.vmem [shape: f32[32,128], index: 0, kind: input, shape index: {}]
  %s1 = inlined_call_operand.vmem [shape: f32[9,128,128], index: 1, kind: input, shape index: {}]
  %s2 = inlined_call_operand.vmem [shape: f32[9,128], index: 2, kind: input, shape index: {}]
  %s3 = inlined_call_operand.vmem [shape: f32[128,128], index: 3, kind: input, shape index: {}]
  %s4 = inlined_call_operand.vmem [shape: f32[2,32,128], index: 4, kind: input, shape index: {}]
  %s5 = inlined_call_operand.vmem [shape: f32[32,128], index: 5, kind: output, shape index: {}]
  %s6 = sld [smem:[#allocation0]]
  $region30: #{residual_block.1} parent=0
    _
  %s8 = ssub.s32 1, %s6
  %s9 = scalar_select 0, %s8, %s6
  // Predicated region
  $region2: #{residual_block.1} parent=0 // pred_check
    _
  $region3: #{residual_block.1} parent=0 // pred_check_branch
    %11 = sbr.rel (0) target = $region5
  $region4: #{residual_block.1} parent=0 // pred_region
    _
  $region5: #{residual_block.1} parent=0 // pred_fallthru
    _
  // Predicated region
  $region6: #{residual_block.1} parent=0 // pred_check
    _
  $region7: #{residual_block.1} parent=0 // pred_check_branch
    %13 = sbr.rel (0) target = $region9
  $region8: #{residual_block.1} parent=0 // pred_region
    _
  $region9: #{residual_block.1} parent=0 // pred_fallthru
    _
  // Predicated region
  $region10: #{residual_block.1} parent=0 // pred_check
    _
  $region11: #{residual_block.1} parent=0 // pred_check_branch
    %15 = sbr.rel (0) target = $region13
  $region12: #{residual_block.1} parent=0 // pred_region
    _
  $region13: #{residual_block.1} parent=0 // pred_fallthru
    _
  // Predicated region
  $region14: #{residual_block.1} parent=0 // pred_check
    _
  $region15: #{residual_block.1} parent=0 // pred_check_branch
    %17 = sbr.rel (0) target = $region17
  $region16: #{residual_block.1} parent=0 // pred_region
    _
  $region17: #{residual_block.1} parent=0 // pred_fallthru
    _
  // Predicated region
  $region18: #{residual_block.1} parent=0 // pred_check
    _
  $region19: #{residual_block.1} parent=0 // pred_check_branch
    %19 = sbr.rel (0) target = $region21
  $region20: #{residual_block.1} parent=0 // pred_region
    _
  $region21: #{residual_block.1} parent=0 // pred_fallthru
    _
  %v20 = vld [vmem:[%s0] sm:$0xff]
  %v21 = vld [vmem:[%s0 + $0x8] sm:$0xff]
  %v22 = vld [vmem:[%s0 + $0x10] sm:$0xff]
  %v23 = vld [vmem:[%s0 + $0x18] sm:$0xff]
  %v24 = vld [vmem:[%s3] sm:$0xff]
  %v25 = vld [vmem:[%s3 + $0x8] sm:$0xff]
  %v26 = vld [vmem:[%s3 + $0x10] sm:$0xff]
  %v27 = vld [vmem:[%s3 + $0x18] sm:$0xff]
  %v28 = vld [vmem:[%s3 + $0x20] sm:$0xff]
  %v29 = vld [vmem:[%s3 + $0x28] sm:$0xff]
  %v30 = vld [vmem:[%s3 + $0x30] sm:$0xff]
  %v31 = vld [vmem:[%s3 + $0x38] sm:$0xff]
  %v32 = vld [vmem:[%s3 + $0x40] sm:$0xff]
  %v33 = vld [vmem:[%s3 + $0x48] sm:$0xff]
  %v34 = vld [vmem:[%s3 + $0x50] sm:$0xff]
  %v35 = vld [vmem:[%s3 + $0x58] sm:$0xff]
  %v36 = vld [vmem:[%s3 + $0x60] sm:$0xff]
  %v37 = vld [vmem:[%s3 + $0x68] sm:$0xff]
  %v38 = vld [vmem:[%s3 + $0x70] sm:$0xff]
  %v39 = vld [vmem:[%s3 + $0x78] sm:$0xff]
  %v40 = vld [vmem:[%s4] sm:$0xff]
  %v41 = vld [vmem:[%s4 + $0x8] sm:$0xff]
  %v42 = vld [vmem:[%s4 + $0x10] sm:$0xff]
  %v43 = vld [vmem:[%s4 + $0x18] sm:$0xff]
  %s44 = scalar_lea.vmem %s4, 32
  %v45 = vld [vmem:[%s44] sm:$0xff]
  %v46 = vld [vmem:[%s44 + $0x8] sm:$0xff]
  %v47 = vld [vmem:[%s44 + $0x10] sm:$0xff]
  %v48 = vld [vmem:[%s44 + $0x18] sm:$0xff]
  %v49 = vld [vmem:[%s2] sm:$0x1]
  %v50 = vld [vmem:[%s2 + $0x1] sm:$0x1]
  %v51 = vld [vmem:[%s2 + $0x2] sm:$0x1]
  %v52 = vrot.slane %v20, 7
  %v53 = vrot.slane %v21, 7
  %v54 = vrot.slane %v22, 7
  %v55 = vrot.slane %v23, 7
  %v56 = vlaneseq
  %v57 = vshrl.u32 %v56, 7
  %vm58 = vcmp.lt.s32.totalorder %v57, 1
  %v59 = vsel %vm58, %v54, %v55
  %v60 = vsel %vm58, %v53, %v54
  %v61 = vsel %vm58, %v52, %v53
  %v62 = vsel %vm58, %v55, %v52
  %v63 = vmul.f32 %v62, %v40
  %v64 = vmul.f32 %v61, %v41
  %v65 = vmul.f32 %v60, %v42
  %v66 = vmul.f32 %v59, %v43
  %v67 = vrot.slane %v20, 1
  %v68 = vrot.slane %v21, 1
  %v69 = vrot.slane %v22, 1
  %v70 = vrot.slane %v23, 1
  %vm71 = vcmp.lt.s32.totalorder %v57, 7
  %v72 = vsel %vm71, %v69, %v70
  %v73 = vsel %vm71, %v68, %v69
  %v74 = vsel %vm71, %v67, %v68
  %v75 = vsel %vm71, %v70, %v67
  %v76 = vmul.f32 %v74, %v45
  %v77 = vmul.f32 %v73, %v46
  %v78 = vmul.f32 %v72, %v47
  %v79 = vmul.f32 %v75, %v48
  %v80 = vld [vmem:[%s1] sm:$0xff]
  %v81 = vld [vmem:[%s1 + $0x8] sm:$0xff]
  %v82 = vld [vmem:[%s1 + $0x10] sm:$0xff]
  %v83 = vld [vmem:[%s1 + $0x18] sm:$0xff]
  %v84 = vld [vmem:[%s1 + $0x20] sm:$0xff]
  %v85 = vld [vmem:[%s1 + $0x28] sm:$0xff]
  %v86 = vld [vmem:[%s1 + $0x30] sm:$0xff]
  %v87 = vld [vmem:[%s1 + $0x38] sm:$0xff]
  %v88 = vld [vmem:[%s1 + $0x40] sm:$0xff]
  %v89 = vld [vmem:[%s1 + $0x48] sm:$0xff]
  %v90 = vld [vmem:[%s1 + $0x50] sm:$0xff]
  %v91 = vld [vmem:[%s1 + $0x58] sm:$0xff]
  %v92 = vld [vmem:[%s1 + $0x60] sm:$0xff]
  %v93 = vld [vmem:[%s1 + $0x68] sm:$0xff]
  %v94 = vld [vmem:[%s1 + $0x70] sm:$0xff]
  %v95 = vld [vmem:[%s1 + $0x78] sm:$0xff]
  %s96 = scalar_lea.vmem %s1, 128
  %v97 = vld [vmem:[%s96] sm:$0xff]
  %v98 = vld [vmem:[%s96 + $0x8] sm:$0xff]
  %v99 = vld [vmem:[%s96 + $0x10] sm:$0xff]
  %v100 = vld [vmem:[%s96 + $0x18] sm:$0xff]
  %v101 = vld [vmem:[%s96 + $0x20] sm:$0xff]
  %v102 = vld [vmem:[%s96 + $0x28] sm:$0xff]
  %v103 = vld [vmem:[%s96 + $0x30] sm:$0xff]
  %v104 = vld [vmem:[%s96 + $0x38] sm:$0xff]
  %v105 = vld [vmem:[%s96 + $0x40] sm:$0xff]
  %v106 = vld [vmem:[%s96 + $0x48] sm:$0xff]
  %v107 = vld [vmem:[%s96 + $0x50] sm:$0xff]
  %v108 = vld [vmem:[%s96 + $0x58] sm:$0xff]
  %v109 = vld [vmem:[%s96 + $0x60] sm:$0xff]
  %v110 = vld [vmem:[%s96 + $0x68] sm:$0xff]
  %v111 = vld [vmem:[%s96 + $0x70] sm:$0xff]
  %v112 = vld [vmem:[%s96 + $0x78] sm:$0xff]
  %113 = vmatprep.subr.mxu0 0.0
  %114 = vmatpush1.msra.mxu0 %v97
  %115 = vmatprep.subr.mxu0 0.0
  %116 = vmatpush1.msra.mxu0 %v98
  %117 = vmatprep.subr.mxu0 0.0
  %118 = vmatpush1.msra.mxu0 %v99
  %119 = vmatprep.subr.mxu0 0.0
  %120 = vmatpush1.msra.mxu0 %v100
  %121 = vmatprep.subr.mxu0 0.0
  %122 = vmatpush1.msra.mxu0 %v101
  %123 = vmatprep.subr.mxu0 0.0
  %124 = vmatpush1.msra.mxu0 %v102
  %125 = vmatprep.subr.mxu0 0.0
  %126 = vmatpush1.msra.mxu0 %v103
  %127 = vmatprep.subr.mxu0 0.0
  %128 = vmatpush1.msra.mxu0 %v104
  %129 = vmatprep.subr.mxu0 0.0
  %130 = vmatpush1.msra.mxu0 %v105
  %131 = vmatprep.subr.mxu0 0.0
  %132 = vmatpush1.msra.mxu0 %v106
  %133 = vmatprep.subr.mxu0 0.0
  %134 = vmatpush1.msra.mxu0 %v107
  %135 = vmatprep.subr.mxu0 0.0
  %136 = vmatpush1.msra.mxu0 %v108
  %137 = vmatprep.subr.mxu0 0.0
  %138 = vmatpush1.msra.mxu0 %v109
  %139 = vmatprep.subr.mxu0 0.0
  %140 = vmatpush1.msra.mxu0 %v110
  %141 = vmatprep.subr.mxu0 0.0
  %142 = vmatpush1.msra.mxu0 %v111
  %143 = vmatprep.subr.mxu0 0.0
  %144 = vmatpush1.msra.mxu0 %v112
  %145 = vmatprep.subr.mxu0 0.0
  %146 = vmatpush1.msra.mxu0 0.0
  %147 = vmatprep.subr.mxu0 0.0
  %148 = vmatpush1.msra.mxu0 0.0
  %149 = vmatprep.subr.mxu0 0.0
  %150 = vmatpush1.msra.mxu0 0.0
  %151 = vmatprep.subr.mxu0 0.0
  %152 = vmatpush1.msra.mxu0 0.0
  %153 = vmatprep.subr.mxu0 0.0
  %154 = vmatpush1.msra.mxu0 0.0
  %155 = vmatprep.subr.mxu0 0.0
  %156 = vmatpush1.msra.mxu0 0.0
  %157 = vmatprep.subr.mxu0 0.0
  %158 = vmatpush1.msra.mxu0 0.0
  %159 = vmatprep.subr.mxu0 0.0
  %160 = vmatpush1.msra.mxu0 0.0
  %161 = vmatprep.subr.mxu0 0.0
  %162 = vmatpush1.msra.mxu0 0.0
  %163 = vmatprep.subr.mxu0 0.0
  %164 = vmatpush1.msra.mxu0 0.0
  %165 = vmatprep.subr.mxu0 0.0
  %166 = vmatpush1.msra.mxu0 0.0
  %167 = vmatprep.subr.mxu0 0.0
  %168 = vmatpush1.msra.mxu0 0.0
  %169 = vmatprep.subr.mxu0 0.0
  %170 = vmatpush1.msra.mxu0 0.0
  %171 = vmatprep.subr.mxu0 0.0
  %172 = vmatpush1.msra.mxu0 0.0
  %173 = vmatprep.subr.mxu0 0.0
  %174 = vmatpush1.msra.mxu0 0.0
  %175 = vmatprep.subr.mxu0 0.0
  %176 = vmatpush1.msra.mxu0 0.0
  %177 = vmatprep.mubr.f32.mxu0 0.0
  %178 = vmatmul.mubr.f32.gmra.mrb[0].mxu0 %v20
  %v179 = vpop.f32.mrb[0].mxu0
  %v180 = vadd.f32 0.0, %v179
  %v181 = vpop.f32.mrb[0].mxu0
  %182 = vmatprep.mubr.f32.mxu0 0.0
  %183 = vmatmul.mubr.f32.gmra.mrb[0].mxu0 %v21
  %v184 = vpop.f32.mrb[0].mxu0
  %v185 = vadd.f32 0.0, %v184
  %v186 = vpop.f32.mrb[0].mxu0
  %187 = vmatprep.mubr.f32.mxu0 0.0
  %188 = vmatmul.mubr.f32.gmra.mrb[0].mxu0 %v22
  %v189 = vpop.f32.mrb[0].mxu0
  %v190 = vadd.f32 0.0, %v189
  %v191 = vpop.f32.mrb[0].mxu0
  %192 = vmatprep.mubr.f32.mxu0 0.0
  %193 = vmatmul.mubr.f32.gmra.mrb[0].mxu0 %v23
  %v194 = vpop.f32.mrb[0].mxu0
  %v195 = vadd.f32 0.0, %v194
  %v196 = vpop.f32.mrb[0].mxu0
  %197 = vdwg.mxu0
  %198 = vmatprep.subr.mxu0 0.0
  %199 = vmatpush1.msra.mxu0 %v80
  %200 = vmatprep.subr.mxu0 0.0
  %201 = vmatpush1.msra.mxu0 %v81
  %202 = vmatprep.subr.mxu0 0.0
  %203 = vmatpush1.msra.mxu0 %v82
  %204 = vmatprep.subr.mxu0 0.0
  %205 = vmatpush1.msra.mxu0 %v83
  %206 = vmatprep.subr.mxu0 0.0
  %207 = vmatpush1.msra.mxu0 %v84
  %208 = vmatprep.subr.mxu0 0.0
  %209 = vmatpush1.msra.mxu0 %v85
  %210 = vmatprep.subr.mxu0 0.0
  %211 = vmatpush1.msra.mxu0 %v86
  %212 = vmatprep.subr.mxu0 0.0
  %213 = vmatpush1.msra.mxu0 %v87
  %214 = vmatprep.subr.mxu0 0.0
  %215 = vmatpush1.msra.mxu0 %v88
  %216 = vmatprep.subr.mxu0 0.0
  %217 = vmatpush1.msra.mxu0 %v89
  %218 = vmatprep.subr.mxu0 0.0
  %219 = vmatpush1.msra.mxu0 %v90
  %220 = vmatprep.subr.mxu0 0.0
  %221 = vmatpush1.msra.mxu0 %v91
  %222 = vmatprep.subr.mxu0 0.0
  %223 = vmatpush1.msra.mxu0 %v92
  %224 = vmatprep.subr.mxu0 0.0
  %225 = vmatpush1.msra.mxu0 %v93
  %226 = vmatprep.subr.mxu0 0.0
  %227 = vmatpush1.msra.mxu0 %v94
  %228 = vmatprep.subr.mxu0 0.0
  %229 = vmatpush1.msra.mxu0 %v95
  %230 = vmatprep.subr.mxu0 0.0
  %231 = vmatpush1.msra.mxu0 0.0
  %232 = vmatprep.subr.mxu0 0.0
  %233 = vmatpush1.msra.mxu0 0.0
  %234 = vmatprep.subr.mxu0 0.0
  %235 = vmatpush1.msra.mxu0 0.0
  %236 = vmatprep.subr.mxu0 0.0
  %237 = vmatpush1.msra.mxu0 0.0
  %238 = vmatprep.subr.mxu0 0.0
  %239 = vmatpush1.msra.mxu0 0.0
  %240 = vmatprep.subr.mxu0 0.0
  %241 = vmatpush1.msra.mxu0 0.0
  %242 = vmatprep.subr.mxu0 0.0
  %243 = vmatpush1.msra.mxu0 0.0
  %244 = vmatprep.subr.mxu0 0.0
  %245 = vmatpush1.msra.mxu0 0.0
  %246 = vmatprep.subr.mxu0 0.0
  %247 = vmatpush1.msra.mxu0 0.0
  %248 = vmatprep.subr.mxu0 0.0
  %249 = vmatpush1.msra.mxu0 0.0
  %250 = vmatprep.subr.mxu0 0.0
  %251 = vmatpush1.msra.mxu0 0.0
  %252 = vmatprep.subr.mxu0 0.0
  %253 = vmatpush1.msra.mxu0 0.0
  %254 = vmatprep.subr.mxu0 0.0
  %255 = vmatpush1.msra.mxu0 0.0
  %256 = vmatprep.subr.mxu0 0.0
  %257 = vmatpush1.msra.mxu0 0.0
  %258 = vmatprep.subr.mxu0 0.0
  %259 = vmatpush1.msra.mxu0 0.0
  %260 = vmatprep.subr.mxu0 0.0
  %261 = vmatpush1.msra.mxu0 0.0
  %262 = vmatprep.mubr.f32.mxu0 0.0
  %263 = vmatmul.mubr.f32.gmra.mrb[0].mxu0 %v63
  %v264 = vpop.f32.mrb[0].mxu0
  %v265 = vadd.f32 %v180, %v264
  %v266 = vpop.f32.mrb[0].mxu0
  %267 = vmatprep.mubr.f32.mxu0 0.0
  %268 = vmatmul.mubr.f32.gmra.mrb[0].mxu0 %v64
  %v269 = vpop.f32.mrb[0].mxu0
  %v270 = vadd.f32 %v185, %v269
  %v271 = vpop.f32.mrb[0].mxu0
  %272 = vmatprep.mubr.f32.mxu0 0.0
  %273 = vmatmul.mubr.f32.gmra.mrb[0].mxu0 %v65
  %v274 = vpop.f32.mrb[0].mxu0
  %v275 = vadd.f32 %v190, %v274
  %v276 = vpop.f32.mrb[0].mxu0
  %277 = vmatprep.mubr.f32.mxu0 0.0
  %278 = vmatmul.mubr.f32.gmra.mrb[0].mxu0 %v66
  %v279 = vpop.f32.mrb[0].mxu0
  %v280 = vadd.f32 %v195, %v279
  %v281 = vpop.f32.mrb[0].mxu0
  %282 = vdwg.mxu0
  %s283 = scalar_lea.vmem %s1, 256
  %v284 = vld [vmem:[%s283] sm:$0xff]
  %v285 = vld [vmem:[%s283 + $0x8] sm:$0xff]
  %v286 = vld [vmem:[%s283 + $0x10] sm:$0xff]
  %v287 = vld [vmem:[%s283 + $0x18] sm:$0xff]
  %v288 = vld [vmem:[%s283 + $0x20] sm:$0xff]
  %v289 = vld [vmem:[%s283 + $0x28] sm:$0xff]
  %v290 = vld [vmem:[%s283 + $0x30] sm:$0xff]
  %v291 = vld [vmem:[%s283 + $0x38] sm:$0xff]
  %v292 = vld [vmem:[%s283 + $0x40] sm:$0xff]
  %v293 = vld [vmem:[%s283 + $0x48] sm:$0xff]
  %v294 = vld [vmem:[%s283 + $0x50] sm:$0xff]
  %v295 = vld [vmem:[%s283 + $0x58] sm:$0xff]
  %v296 = vld [vmem:[%s283 + $0x60] sm:$0xff]
  %v297 = vld [vmem:[%s283 + $0x68] sm:$0xff]
  %v298 = vld [vmem:[%s283 + $0x70] sm:$0xff]
  %v299 = vld [vmem:[%s283 + $0x78] sm:$0xff]
  %300 = vmatprep.subr.mxu0 0.0
  %301 = vmatpush1.msra.mxu0 %v284
  %302 = vmatprep.subr.mxu0 0.0
  %303 = vmatpush1.msra.mxu0 %v285
  %304 = vmatprep.subr.mxu0 0.0
  %305 = vmatpush1.msra.mxu0 %v286
  %306 = vmatprep.subr.mxu0 0.0
  %307 = vmatpush1.msra.mxu0 %v287
  %308 = vmatprep.subr.mxu0 0.0
  %309 = vmatpush1.msra.mxu0 %v288
  %310 = vmatprep.subr.mxu0 0.0
  %311 = vmatpush1.msra.mxu0 %v289
  %312 = vmatprep.subr.mxu0 0.0
  %313 = vmatpush1.msra.mxu0 %v290
  %314 = vmatprep.subr.mxu0 0.0
  %315 = vmatpush1.msra.mxu0 %v291
  %316 = vmatprep.subr.mxu0 0.0
  %317 = vmatpush1.msra.mxu0 %v292
  %318 = vmatprep.subr.mxu0 0.0
  %319 = vmatpush1.msra.mxu0 %v293
  %320 = vmatprep.subr.mxu0 0.0
  %321 = vmatpush1.msra.mxu0 %v294
  %322 = vmatprep.subr.mxu0 0.0
  %323 = vmatpush1.msra.mxu0 %v295
  %324 = vmatprep.subr.mxu0 0.0
  %325 = vmatpush1.msra.mxu0 %v296
  %326 = vmatprep.subr.mxu0 0.0
  %327 = vmatpush1.msra.mxu0 %v297
  %328 = vmatprep.subr.mxu0 0.0
  %329 = vmatpush1.msra.mxu0 %v298
  %330 = vmatprep.subr.mxu0 0.0
  %331 = vmatpush1.msra.mxu0 %v299
  %332 = vmatprep.subr.mxu0 0.0
  %333 = vmatpush1.msra.mxu0 0.0
  %334 = vmatprep.subr.mxu0 0.0
  %335 = vmatpush1.msra.mxu0 0.0
  %336 = vmatprep.subr.mxu0 0.0
  %337 = vmatpush1.msra.mxu0 0.0
  %338 = vmatprep.subr.mxu0 0.0
  %339 = vmatpush1.msra.mxu0 0.0
  %340 = vmatprep.subr.mxu0 0.0
  %341 = vmatpush1.msra.mxu0 0.0
  %342 = vmatprep.subr.mxu0 0.0
  %343 = vmatpush1.msra.mxu0 0.0
  %344 = vmatprep.subr.mxu0 0.0
  %345 = vmatpush1.msra.mxu0 0.0
  %346 = vmatprep.subr.mxu0 0.0
  %347 = vmatpush1.msra.mxu0 0.0
  %348 = vmatprep.subr.mxu0 0.0
  %349 = vmatpush1.msra.mxu0 0.0
  %350 = vmatprep.subr.mxu0 0.0
  %351 = vmatpush1.msra.mxu0 0.0
  %352 = vmatprep.subr.mxu0 0.0
  %353 = vmatpush1.msra.mxu0 0.0
  %354 = vmatprep.subr.mxu0 0.0
  %355 = vmatpush1.msra.mxu0 0.0
  %356 = vmatprep.subr.mxu0 0.0
  %357 = vmatpush1.msra.mxu0 0.0
  %358 = vmatprep.subr.mxu0 0.0
  %359 = vmatpush1.msra.mxu0 0.0
  %360 = vmatprep.subr.mxu0 0.0
  %361 = vmatpush1.msra.mxu0 0.0
  %362 = vmatprep.subr.mxu0 0.0
  %363 = vmatpush1.msra.mxu0 0.0
  %364 = vmatprep.mubr.f32.mxu0 0.0
  %365 = vmatmul.mubr.f32.gmra.mrb[0].mxu0 %v76
  %v366 = vpop.f32.mrb[0].mxu0
  %v367 = vadd.f32 0.0, %v366
  %v368 = vpop.f32.mrb[0].mxu0
  %369 = vmatprep.mubr.f32.mxu0 0.0
  %370 = vmatmul.mubr.f32.gmra.mrb[0].mxu0 %v77
  %v371 = vpop.f32.mrb[0].mxu0
  %v372 = vadd.f32 0.0, %v371
  %v373 = vpop.f32.mrb[0].mxu0
  %374 = vmatprep.mubr.f32.mxu0 0.0
  %375 = vmatmul.mubr.f32.gmra.mrb[0].mxu0 %v78
  %v376 = vpop.f32.mrb[0].mxu0
  %v377 = vadd.f32 0.0, %v376
  %v378 = vpop.f32.mrb[0].mxu0
  %379 = vmatprep.mubr.f32.mxu0 0.0
  %380 = vmatmul.mubr.f32.gmra.mrb[0].mxu0 %v79
  %v381 = vpop.f32.mrb[0].mxu0
  %v382 = vadd.f32 0.0, %v381
  %v383 = vpop.f32.mrb[0].mxu0
  %384 = vdwg.mxu0
  %v385 = vadd.f32 %v265, %v367
  %v386 = vadd.f32 %v270, %v372
  %v387 = vadd.f32 %v275, %v377
  %v388 = vadd.f32 %v280, %v382
  %v389 = vlaneseq
  %v390 = vshrl.u32 %v389, 7
  %v391 = vsub.s32 0, %v390
  %v392 = vrot.slane %v49, %v391
  %v393 = vadd.f32 %v385, %v392
  %v394 = vadd.f32 %v386, %v392
  %v395 = vadd.f32 %v387, %v392
  %v396 = vadd.f32 %v388, %v392
  %v397 = vmul.f32 %v393, 0.01
  %v398 = vmul.f32 %v394, 0.01
  %v399 = vmul.f32 %v395, 0.01
  %v400 = vmul.f32 %v396, 0.01
  %v401 = vmax.f32 %v393, %v397
  %v402 = vmax.f32 %v394, %v398
  %v403 = vmax.f32 %v395, %v399
  %v404 = vmax.f32 %v396, %v400
  %v405 = vadd.f32 %v401, %v402
  %v406 = vadd.f32 %v405, %v403
  %v407 = vadd.f32 %v406, %v404
  %v408 = vrot.slane %v407, 4
  %v409 = vadd.f32 %v407, %v408
  %v410 = vrot.slane %v409, 2
  %v411 = vadd.f32 %v409, %v410
  %v412 = vrot.slane %v411, 1
  %v413 = vadd.f32 %v411, %v412
  %414 = vmatprep.subr.mxu0 0.0
  %415 = vmatpush1.msra.mxu0 %v24
  %416 = vmatprep.subr.mxu0 0.0
  %417 = vmatpush1.msra.mxu0 %v25
  %418 = vmatprep.subr.mxu0 0.0
  %419 = vmatpush1.msra.mxu0 %v26
  %420 = vmatprep.subr.mxu0 0.0
  %421 = vmatpush1.msra.mxu0 %v27
  %422 = vmatprep.subr.mxu0 0.0
  %423 = vmatpush1.msra.mxu0 %v28
  %424 = vmatprep.subr.mxu0 0.0
  %425 = vmatpush1.msra.mxu0 %v29
  %426 = vmatprep.subr.mxu0 0.0
  %427 = vmatpush1.msra.mxu0 %v30
  %428 = vmatprep.subr.mxu0 0.0
  %429 = vmatpush1.msra.mxu0 %v31
  %430 = vmatprep.subr.mxu0 0.0
  %431 = vmatpush1.msra.mxu0 %v32
  %432 = vmatprep.subr.mxu0 0.0
  %433 = vmatpush1.msra.mxu0 %v33
  %434 = vmatprep.subr.mxu0 0.0
  %435 = vmatpush1.msra.mxu0 %v34
  %436 = vmatprep.subr.mxu0 0.0
  %437 = vmatpush1.msra.mxu0 %v35
  %438 = vmatprep.subr.mxu0 0.0
  %439 = vmatpush1.msra.mxu0 %v36
  %440 = vmatprep.subr.mxu0 0.0
  %441 = vmatpush1.msra.mxu0 %v37
  %442 = vmatprep.subr.mxu0 0.0
  %443 = vmatpush1.msra.mxu0 %v38
  %444 = vmatprep.subr.mxu0 0.0
  %445 = vmatpush1.msra.mxu0 %v39
  %446 = vmatprep.subr.mxu0 0.0
  %447 = vmatpush1.msra.mxu0 0.0
  %448 = vmatprep.subr.mxu0 0.0
  %449 = vmatpush1.msra.mxu0 0.0
  %450 = vmatprep.subr.mxu0 0.0
  %451 = vmatpush1.msra.mxu0 0.0
  %452 = vmatprep.subr.mxu0 0.0
  %453 = vmatpush1.msra.mxu0 0.0
  %454 = vmatprep.subr.mxu0 0.0
  %455 = vmatpush1.msra.mxu0 0.0
  %456 = vmatprep.subr.mxu0 0.0
  %457 = vmatpush1.msra.mxu0 0.0
  %458 = vmatprep.subr.mxu0 0.0
  %459 = vmatpush1.msra.mxu0 0.0
  %460 = vmatprep.subr.mxu0 0.0
  %461 = vmatpush1.msra.mxu0 0.0
  %462 = vmatprep.subr.mxu0 0.0
  %463 = vmatpush1.msra.mxu0 0.0
  %464 = vmatprep.subr.mxu0 0.0
  %465 = vmatpush1.msra.mxu0 0.0
  %466 = vmatprep.subr.mxu0 0.0
  %467 = vmatpush1.msra.mxu0 0.0
  %468 = vmatprep.subr.mxu0 0.0
  %469 = vmatpush1.msra.mxu0 0.0
  %470 = vmatprep.subr.mxu0 0.0
  %471 = vmatpush1.msra.mxu0 0.0
  %472 = vmatprep.subr.mxu0 0.0
  %473 = vmatpush1.msra.mxu0 0.0
  %474 = vmatprep.subr.mxu0 0.0
  %475 = vmatpush1.msra.mxu0 0.0
  %476 = vmatprep.subr.mxu0 0.0
  %477 = vmatpush1.msra.mxu0 0.0
  %478 = vmatprep.mubr.f32.mxu0 0.0
  %479 = vmatmul.mubr.f32.gmra.mrb[0].mxu0 %v413
  %v480 = vpop.f32.mrb[0].mxu0
  %v481 = vadd.f32 0.0, %v480
  %v482 = vpop.f32.mrb[0].mxu0
  %483 = vdwg.mxu0
  %v484 = vmul.f32 %v481, 0.001953125
  %v485 = vlaneseq
  %v486 = vshrl.u32 %v485, 7
  %v487 = vsub.s32 0, %v486
  %v488 = vrot.slane %v484, %v487
  %v489 = vsub.f32 %v401, %v488
  %v490 = vsub.f32 %v402, %v488
  %v491 = vsub.f32 %v403, %v488
  %v492 = vsub.f32 %v404, %v488
  %v493 = vmul.f32 %v489, %v489
  %v494 = vmul.f32 %v490, %v490
  %v495 = vmul.f32 %v491, %v491
  %v496 = vmul.f32 %v492, %v492
  %v497 = vadd.f32 %v493, %v494
  %v498 = vadd.f32 %v497, %v495
  %v499 = vadd.f32 %v498, %v496
  %v500 = vrot.slane %v499, 4
  %v501 = vadd.f32 %v499, %v500
  %v502 = vrot.slane %v501, 2
  %v503 = vadd.f32 %v501, %v502
  %v504 = vrot.slane %v503, 1
  %v505 = vadd.f32 %v503, %v504
  %506 = vmatprep.subr.mxu0 0.0
  %507 = vmatpush1.msra.mxu0 %v24
  %508 = vmatprep.subr.mxu0 0.0
  %509 = vmatpush1.msra.mxu0 %v25
  %510 = vmatprep.subr.mxu0 0.0
  %511 = vmatpush1.msra.mxu0 %v26
  %512 = vmatprep.subr.mxu0 0.0
  %513 = vmatpush1.msra.mxu0 %v27
  %514 = vmatprep.subr.mxu0 0.0
  %515 = vmatpush1.msra.mxu0 %v28
  %516 = vmatprep.subr.mxu0 0.0
  %517 = vmatpush1.msra.mxu0 %v29
  %518 = vmatprep.subr.mxu0 0.0
  %519 = vmatpush1.msra.mxu0 %v30
  %520 = vmatprep.subr.mxu0 0.0
  %521 = vmatpush1.msra.mxu0 %v31
  %522 = vmatprep.subr.mxu0 0.0
  %523 = vmatpush1.msra.mxu0 %v32
  %524 = vmatprep.subr.mxu0 0.0
  %525 = vmatpush1.msra.mxu0 %v33
  %526 = vmatprep.subr.mxu0 0.0
  %527 = vmatpush1.msra.mxu0 %v34
  %528 = vmatprep.subr.mxu0 0.0
  %529 = vmatpush1.msra.mxu0 %v35
  %530 = vmatprep.subr.mxu0 0.0
  %531 = vmatpush1.msra.mxu0 %v36
  %532 = vmatprep.subr.mxu0 0.0
  %533 = vmatpush1.msra.mxu0 %v37
  %534 = vmatprep.subr.mxu0 0.0
  %535 = vmatpush1.msra.mxu0 %v38
  %536 = vmatprep.subr.mxu0 0.0
  %537 = vmatpush1.msra.mxu0 %v39
  %538 = vmatprep.subr.mxu0 0.0
  %539 = vmatpush1.msra.mxu0 0.0
  %540 = vmatprep.subr.mxu0 0.0
  %541 = vmatpush1.msra.mxu0 0.0
  %542 = vmatprep.subr.mxu0 0.0
  %543 = vmatpush1.msra.mxu0 0.0
  %544 = vmatprep.subr.mxu0 0.0
  %545 = vmatpush1.msra.mxu0 0.0
  %546 = vmatprep.subr.mxu0 0.0
  %547 = vmatpush1.msra.mxu0 0.0
  %548 = vmatprep.subr.mxu0 0.0
  %549 = vmatpush1.msra.mxu0 0.0
  %550 = vmatprep.subr.mxu0 0.0
  %551 = vmatpush1.msra.mxu0 0.0
  %552 = vmatprep.subr.mxu0 0.0
  %553 = vmatpush1.msra.mxu0 0.0
  %554 = vmatprep.subr.mxu0 0.0
  %555 = vmatpush1.msra.mxu0 0.0
  %556 = vmatprep.subr.mxu0 0.0
  %557 = vmatpush1.msra.mxu0 0.0
  %558 = vmatprep.subr.mxu0 0.0
  %559 = vmatpush1.msra.mxu0 0.0
  %560 = vmatprep.subr.mxu0 0.0
  %561 = vmatpush1.msra.mxu0 0.0
  %562 = vmatprep.subr.mxu0 0.0
  %563 = vmatpush1.msra.mxu0 0.0
  %564 = vmatprep.subr.mxu0 0.0
  %565 = vmatpush1.msra.mxu0 0.0
  %566 = vmatprep.subr.mxu0 0.0
  %567 = vmatpush1.msra.mxu0 0.0
  %568 = vmatprep.subr.mxu0 0.0
  %569 = vmatpush1.msra.mxu0 0.0
  %570 = vmatprep.mubr.f32.mxu0 0.0
  %571 = vmatmul.mubr.f32.gmra.mrb[0].mxu0 %v505
  %v572 = vpop.f32.mrb[0].mxu0
  %v573 = vadd.f32 0.0, %v572
  %v574 = vpop.f32.mrb[0].mxu0
  %575 = vdwg.mxu0
  %v576 = vmul.f32 %v573, 0.001953125
  %v577 = vadd.f32 %v576, 1e-05
  %v578 = vrsqrt.pop %v577
  %v579 = vmul.f32 %v50, %v578
  %v580 = vmul.f32 %v484, %v579
  %v581 = vsub.f32 %v51, %v580
  %v582 = vlaneseq
  %v583 = vshrl.u32 %v582, 7
  %v584 = vsub.s32 0, %v583
  %v585 = vrot.slane %v579, %v584
  %v586 = vmul.f32 %v401, %v585
  %v587 = vmul.f32 %v402, %v585
  %v588 = vmul.f32 %v403, %v585
  %v589 = vmul.f32 %v404, %v585
  %v590 = vlaneseq
  %v591 = vshrl.u32 %v590, 7
  %v592 = vsub.s32 0, %v591
  %v593 = vrot.slane %v581, %v592
  %v594 = vadd.f32 %v586, %v593
  %v595 = vadd.f32 %v587, %v593
  %v596 = vadd.f32 %v588, %v593
  %v597 = vadd.f32 %v589, %v593
  %v598 = vld [vmem:[%s2 + $0x3] sm:$0x1]
  %v599 = vld [vmem:[%s2 + $0x4] sm:$0x1]
  %v600 = vld [vmem:[%s2 + $0x5] sm:$0x1]
  %v601 = vrot.slane %v594, 7
  %v602 = vrot.slane %v595, 7
  %v603 = vrot.slane %v596, 7
  %v604 = vrot.slane %v597, 7
  %v605 = vsel %vm58, %v603, %v604
  %v606 = vsel %vm58, %v602, %v603
  %v607 = vsel %vm58, %v601, %v602
  %v608 = vsel %vm58, %v604, %v601
  %v609 = vmul.f32 %v608, %v40
  %v610 = vmul.f32 %v607, %v41
  %v611 = vmul.f32 %v606, %v42
  %v612 = vmul.f32 %v605, %v43
  %v613 = vrot.slane %v594, 1
  %v614 = vrot.slane %v595, 1
  %v615 = vrot.slane %v596, 1
  %v616 = vrot.slane %v597, 1
  %v617 = vsel %vm71, %v615, %v616
  %v618 = vsel %vm71, %v614, %v615
  %v619 = vsel %vm71, %v613, %v614
  %v620 = vsel %vm71, %v616, %v613
  %v621 = vmul.f32 %v619, %v45
  %v622 = vmul.f32 %v618, %v46
  %v623 = vmul.f32 %v617, %v47
  %v624 = vmul.f32 %v620, %v48
  %s625 = scalar_lea.vmem %s1, 384
  %v626 = vld [vmem:[%s625] sm:$0xff]
  %v627 = vld [vmem:[%s625 + $0x8] sm:$0xff]
  %v628 = vld [vmem:[%s625 + $0x10] sm:$0xff]
  %v629 = vld [vmem:[%s625 + $0x18] sm:$0xff]
  %v630 = vld [vmem:[%s625 + $0x20] sm:$0xff]
  %v631 = vld [vmem:[%s625 + $0x28] sm:$0xff]
  %v632 = vld [vmem:[%s625 + $0x30] sm:$0xff]
  %v633 = vld [vmem:[%s625 + $0x38] sm:$0xff]
  %v634 = vld [vmem:[%s625 + $0x40] sm:$0xff]
  %v635 = vld [vmem:[%s625 + $0x48] sm:$0xff]
  %v636 = vld [vmem:[%s625 + $0x50] sm:$0xff]
  %v637 = vld [vmem:[%s625 + $0x58] sm:$0xff]
  %v638 = vld [vmem:[%s625 + $0x60] sm:$0xff]
  %v639 = vld [vmem:[%s625 + $0x68] sm:$0xff]
  %v640 = vld [vmem:[%s625 + $0x70] sm:$0xff]
  %v641 = vld [vmem:[%s625 + $0x78] sm:$0xff]
  %s642 = scalar_lea.vmem %s1, 512
  %v643 = vld [vmem:[%s642] sm:$0xff]
  %v644 = vld [vmem:[%s642 + $0x8] sm:$0xff]
  %v645 = vld [vmem:[%s642 + $0x10] sm:$0xff]
  %v646 = vld [vmem:[%s642 + $0x18] sm:$0xff]
  %v647 = vld [vmem:[%s642 + $0x20] sm:$0xff]
  %v648 = vld [vmem:[%s642 + $0x28] sm:$0xff]
  %v649 = vld [vmem:[%s642 + $0x30] sm:$0xff]
  %v650 = vld [vmem:[%s642 + $0x38] sm:$0xff]
  %v651 = vld [vmem:[%s642 + $0x40] sm:$0xff]
  %v652 = vld [vmem:[%s642 + $0x48] sm:$0xff]
  %v653 = vld [vmem:[%s642 + $0x50] sm:$0xff]
  %v654 = vld [vmem:[%s642 + $0x58] sm:$0xff]
  %v655 = vld [vmem:[%s642 + $0x60] sm:$0xff]
  %v656 = vld [vmem:[%s642 + $0x68] sm:$0xff]
  %v657 = vld [vmem:[%s642 + $0x70] sm:$0xff]
  %v658 = vld [vmem:[%s642 + $0x78] sm:$0xff]
  %659 = vmatprep.subr.mxu0 0.0
  %660 = vmatpush1.msra.mxu0 %v643
  %661 = vmatprep.subr.mxu0 0.0
  %662 = vmatpush1.msra.mxu0 %v644
  %663 = vmatprep.subr.mxu0 0.0
  %664 = vmatpush1.msra.mxu0 %v645
  %665 = vmatprep.subr.mxu0 0.0
  %666 = vmatpush1.msra.mxu0 %v646
  %667 = vmatprep.subr.mxu0 0.0
  %668 = vmatpush1.msra.mxu0 %v647
  %669 = vmatprep.subr.mxu0 0.0
  %670 = vmatpush1.msra.mxu0 %v648
  %671 = vmatprep.subr.mxu0 0.0
  %672 = vmatpush1.msra.mxu0 %v649
  %673 = vmatprep.subr.mxu0 0.0
  %674 = vmatpush1.msra.mxu0 %v650
  %675 = vmatprep.subr.mxu0 0.0
  %676 = vmatpush1.msra.mxu0 %v651
  %677 = vmatprep.subr.mxu0 0.0
  %678 = vmatpush1.msra.mxu0 %v652
  %679 = vmatprep.subr.mxu0 0.0
  %680 = vmatpush1.msra.mxu0 %v653
  %681 = vmatprep.subr.mxu0 0.0
  %682 = vmatpush1.msra.mxu0 %v654
  %683 = vmatprep.subr.mxu0 0.0
  %684 = vmatpush1.msra.mxu0 %v655
  %685 = vmatprep.subr.mxu0 0.0
  %686 = vmatpush1.msra.mxu0 %v656
  %687 = vmatprep.subr.mxu0 0.0
  %688 = vmatpush1.msra.mxu0 %v657
  %689 = vmatprep.subr.mxu0 0.0
  %690 = vmatpush1.msra.mxu0 %v658
  %691 = vmatprep.subr.mxu0 0.0
  %692 = vmatpush1.msra.mxu0 0.0
  %693 = vmatprep.subr.mxu0 0.0
  %694 = vmatpush1.msra.mxu0 0.0
  %695 = vmatprep.subr.mxu0 0.0
  %696 = vmatpush1.msra.mxu0 0.0
  %697 = vmatprep.subr.mxu0 0.0
  %698 = vmatpush1.msra.mxu0 0.0
  %699 = vmatprep.subr.mxu0 0.0
  %700 = vmatpush1.msra.mxu0 0.0
  %701 = vmatprep.subr.mxu0 0.0
  %702 = vmatpush1.msra.mxu0 0.0
  %703 = vmatprep.subr.mxu0 0.0
  %704 = vmatpush1.msra.mxu0 0.0
  %705 = vmatprep.subr.mxu0 0.0
  %706 = vmatpush1.msra.mxu0 0.0
  %707 = vmatprep.subr.mxu0 0.0
  %708 = vmatpush1.msra.mxu0 0.0
  %709 = vmatprep.subr.mxu0 0.0
  %710 = vmatpush1.msra.mxu0 0.0
  %711 = vmatprep.subr.mxu0 0.0
  %712 = vmatpush1.msra.mxu0 0.0
  %713 = vmatprep.subr.mxu0 0.0
  %714 = vmatpush1.msra.mxu0 0.0
  %715 = vmatprep.subr.mxu0 0.0
  %716 = vmatpush1.msra.mxu0 0.0
  %717 = vmatprep.subr.mxu0 0.0
  %718 = vmatpush1.msra.mxu0 0.0
  %719 = vmatprep.subr.mxu0 0.0
  %720 = vmatpush1.msra.mxu0 0.0
  %721 = vmatprep.subr.mxu0 0.0
  %722 = vmatpush1.msra.mxu0 0.0
  %723 = vmatprep.mubr.f32.mxu0 0.0
  %724 = vmatmul.mubr.f32.gmra.mrb[0].mxu0 %v594
  %v725 = vpop.f32.mrb[0].mxu0
  %v726 = vadd.f32 0.0, %v725
  %v727 = vpop.f32.mrb[0].mxu0
  %728 = vmatprep.mubr.f32.mxu0 0.0
  %729 = vmatmul.mubr.f32.gmra.mrb[0].mxu0 %v595
  %v730 = vpop.f32.mrb[0].mxu0
  %v731 = vadd.f32 0.0, %v730
  %v732 = vpop.f32.mrb[0].mxu0
  %733 = vmatprep.mubr.f32.mxu0 0.0
  %734 = vmatmul.mubr.f32.gmra.mrb[0].mxu0 %v596
  %v735 = vpop.f32.mrb[0].mxu0
  %v736 = vadd.f32 0.0, %v735
  %v737 = vpop.f32.mrb[0].mxu0
  %738 = vmatprep.mubr.f32.mxu0 0.0
  %739 = vmatmul.mubr.f32.gmra.mrb[0].mxu0 %v597
  %v740 = vpop.f32.mrb[0].mxu0
  %v741 = vadd.f32 0.0, %v740
  %v742 = vpop.f32.mrb[0].mxu0
  %743 = vdwg.mxu0
  %744 = vmatprep.subr.mxu0 0.0
  %745 = vmatpush1.msra.mxu0 %v626
  %746 = vmatprep.subr.mxu0 0.0
  %747 = vmatpush1.msra.mxu0 %v627
  %748 = vmatprep.subr.mxu0 0.0
  %749 = vmatpush1.msra.mxu0 %v628
  %750 = vmatprep.subr.mxu0 0.0
  %751 = vmatpush1.msra.mxu0 %v629
  %752 = vmatprep.subr.mxu0 0.0
  %753 = vmatpush1.msra.mxu0 %v630
  %754 = vmatprep.subr.mxu0 0.0
  %755 = vmatpush1.msra.mxu0 %v631
  %756 = vmatprep.subr.mxu0 0.0
  %757 = vmatpush1.msra.mxu0 %v632
  %758 = vmatprep.subr.mxu0 0.0
  %759 = vmatpush1.msra.mxu0 %v633
  %760 = vmatprep.subr.mxu0 0.0
  %761 = vmatpush1.msra.mxu0 %v634
  %762 = vmatprep.subr.mxu0 0.0
  %763 = vmatpush1.msra.mxu0 %v635
  %764 = vmatprep.subr.mxu0 0.0
  %765 = vmatpush1.msra.mxu0 %v636
  %766 = vmatprep.subr.mxu0 0.0
  %767 = vmatpush1.msra.mxu0 %v637
  %768 = vmatprep.subr.mxu0 0.0
  %769 = vmatpush1.msra.mxu0 %v638
  %770 = vmatprep.subr.mxu0 0.0
  %771 = vmatpush1.msra.mxu0 %v639
  %772 = vmatprep.subr.mxu0 0.0
  %773 = vmatpush1.msra.mxu0 %v640
  %774 = vmatprep.subr.mxu0 0.0
  %775 = vmatpush1.msra.mxu0 %v641
  %776 = vmatprep.subr.mxu0 0.0
  %777 = vmatpush1.msra.mxu0 0.0
  %778 = vmatprep.subr.mxu0 0.0
  %779 = vmatpush1.msra.mxu0 0.0
  %780 = vmatprep.subr.mxu0 0.0
  %781 = vmatpush1.msra.mxu0 0.0
  %782 = vmatprep.subr.mxu0 0.0
  %783 = vmatpush1.msra.mxu0 0.0
  %784 = vmatprep.subr.mxu0 0.0
  %785 = vmatpush1.msra.mxu0 0.0
  %786 = vmatprep.subr.mxu0 0.0
  %787 = vmatpush1.msra.mxu0 0.0
  %788 = vmatprep.subr.mxu0 0.0
  %789 = vmatpush1.msra.mxu0 0.0
  %790 = vmatprep.subr.mxu0 0.0
  %791 = vmatpush1.msra.mxu0 0.0
  %792 = vmatprep.subr.mxu0 0.0
  %793 = vmatpush1.msra.mxu0 0.0
  %794 = vmatprep.subr.mxu0 0.0
  %795 = vmatpush1.msra.mxu0 0.0
  %796 = vmatprep.subr.mxu0 0.0
  %797 = vmatpush1.msra.mxu0 0.0
  %798 = vmatprep.subr.mxu0 0.0
  %799 = vmatpush1.msra.mxu0 0.0
  %800 = vmatprep.subr.mxu0 0.0
  %801 = vmatpush1.msra.mxu0 0.0
  %802 = vmatprep.subr.mxu0 0.0
  %803 = vmatpush1.msra.mxu0 0.0
  %804 = vmatprep.subr.mxu0 0.0
  %805 = vmatpush1.msra.mxu0 0.0
  %806 = vmatprep.subr.mxu0 0.0
  %807 = vmatpush1.msra.mxu0 0.0
  %808 = vmatprep.mubr.f32.mxu0 0.0
  %809 = vmatmul.mubr.f32.gmra.mrb[0].mxu0 %v609
  %v810 = vpop.f32.mrb[0].mxu0
  %v811 = vadd.f32 %v726, %v810
  %v812 = vpop.f32.mrb[0].mxu0
  %813 = vmatprep.mubr.f32.mxu0 0.0
  %814 = vmatmul.mubr.f32.gmra.mrb[0].mxu0 %v610
  %v815 = vpop.f32.mrb[0].mxu0
  %v816 = vadd.f32 %v731, %v815
  %v817 = vpop.f32.mrb[0].mxu0
  %818 = vmatprep.mubr.f32.mxu0 0.0
  %819 = vmatmul.mubr.f32.gmra.mrb[0].mxu0 %v611
  %v820 = vpop.f32.mrb[0].mxu0
  %v821 = vadd.f32 %v736, %v820
  %v822 = vpop.f32.mrb[0].mxu0
  %823 = vmatprep.mubr.f32.mxu0 0.0
  %824 = vmatmul.mubr.f32.gmra.mrb[0].mxu0 %v612
  %v825 = vpop.f32.mrb[0].mxu0
  %v826 = vadd.f32 %v741, %v825
  %v827 = vpop.f32.mrb[0].mxu0
  %828 = vdwg.mxu0
  %s829 = scalar_lea.vmem %s1, 640
  %v830 = vld [vmem:[%s829] sm:$0xff]
  %v831 = vld [vmem:[%s829 + $0x8] sm:$0xff]
  %v832 = vld [vmem:[%s829 + $0x10] sm:$0xff]
  %v833 = vld [vmem:[%s829 + $0x18] sm:$0xff]
  %v834 = vld [vmem:[%s829 + $0x20] sm:$0xff]
  %v835 = vld [vmem:[%s829 + $0x28] sm:$0xff]
  %v836 = vld [vmem:[%s829 + $0x30] sm:$0xff]
  %v837 = vld [vmem:[%s829 + $0x38] sm:$0xff]
  %v838 = vld [vmem:[%s829 + $0x40] sm:$0xff]
  %v839 = vld [vmem:[%s829 + $0x48] sm:$0xff]
  %v840 = vld [vmem:[%s829 + $0x50] sm:$0xff]
  %v841 = vld [vmem:[%s829 + $0x58] sm:$0xff]
  %v842 = vld [vmem:[%s829 + $0x60] sm:$0xff]
  %v843 = vld [vmem:[%s829 + $0x68] sm:$0xff]
  %v844 = vld [vmem:[%s829 + $0x70] sm:$0xff]
  %v845 = vld [vmem:[%s829 + $0x78] sm:$0xff]
  %846 = vmatprep.subr.mxu0 0.0
  %847 = vmatpush1.msra.mxu0 %v830
  %848 = vmatprep.subr.mxu0 0.0
  %849 = vmatpush1.msra.mxu0 %v831
  %850 = vmatprep.subr.mxu0 0.0
  %851 = vmatpush1.msra.mxu0 %v832
  %852 = vmatprep.subr.mxu0 0.0
  %853 = vmatpush1.msra.mxu0 %v833
  %854 = vmatprep.subr.mxu0 0.0
  %855 = vmatpush1.msra.mxu0 %v834
  %856 = vmatprep.subr.mxu0 0.0
  %857 = vmatpush1.msra.mxu0 %v835
  %858 = vmatprep.subr.mxu0 0.0
  %859 = vmatpush1.msra.mxu0 %v836
  %860 = vmatprep.subr.mxu0 0.0
  %861 = vmatpush1.msra.mxu0 %v837
  %862 = vmatprep.subr.mxu0 0.0
  %863 = vmatpush1.msra.mxu0 %v838
  %864 = vmatprep.subr.mxu0 0.0
  %865 = vmatpush1.msra.mxu0 %v839
  %866 = vmatprep.subr.mxu0 0.0
  %867 = vmatpush1.msra.mxu0 %v840
  %868 = vmatprep.subr.mxu0 0.0
  %869 = vmatpush1.msra.mxu0 %v841
  %870 = vmatprep.subr.mxu0 0.0
  %871 = vmatpush1.msra.mxu0 %v842
  %872 = vmatprep.subr.mxu0 0.0
  %873 = vmatpush1.msra.mxu0 %v843
  %874 = vmatprep.subr.mxu0 0.0
  %875 = vmatpush1.msra.mxu0 %v844
  %876 = vmatprep.subr.mxu0 0.0
  %877 = vmatpush1.msra.mxu0 %v845
  %878 = vmatprep.subr.mxu0 0.0
  %879 = vmatpush1.msra.mxu0 0.0
  %880 = vmatprep.subr.mxu0 0.0
  %881 = vmatpush1.msra.mxu0 0.0
  %882 = vmatprep.subr.mxu0 0.0
  %883 = vmatpush1.msra.mxu0 0.0
  %884 = vmatprep.subr.mxu0 0.0
  %885 = vmatpush1.msra.mxu0 0.0
  %886 = vmatprep.subr.mxu0 0.0
  %887 = vmatpush1.msra.mxu0 0.0
  %888 = vmatprep.subr.mxu0 0.0
  %889 = vmatpush1.msra.mxu0 0.0
  %890 = vmatprep.subr.mxu0 0.0
  %891 = vmatpush1.msra.mxu0 0.0
  %892 = vmatprep.subr.mxu0 0.0
  %893 = vmatpush1.msra.mxu0 0.0
  %894 = vmatprep.subr.mxu0 0.0
  %895 = vmatpush1.msra.mxu0 0.0
  %896 = vmatprep.subr.mxu0 0.0
  %897 = vmatpush1.msra.mxu0 0.0
  %898 = vmatprep.subr.mxu0 0.0
  %899 = vmatpush1.msra.mxu0 0.0
  %900 = vmatprep.subr.mxu0 0.0
  %901 = vmatpush1.msra.mxu0 0.0
  %902 = vmatprep.subr.mxu0 0.0
  %903 = vmatpush1.msra.mxu0 0.0
  %904 = vmatprep.subr.mxu0 0.0
  %905 = vmatpush1.msra.mxu0 0.0
  %906 = vmatprep.subr.mxu0 0.0
  %907 = vmatpush1.msra.mxu0 0.0
  %908 = vmatprep.subr.mxu0 0.0
  %909 = vmatpush1.msra.mxu0 0.0
  %910 = vmatprep.mubr.f32.mxu0 0.0
  %911 = vmatmul.mubr.f32.gmra.mrb[0].mxu0 %v621
  %v912 = vpop.f32.mrb[0].mxu0
  %v913 = vadd.f32 0.0, %v912
  %v914 = vpop.f32.mrb[0].mxu0
  %915 = vmatprep.mubr.f32.mxu0 0.0
  %916 = vmatmul.mubr.f32.gmra.mrb[0].mxu0 %v622
  %v917 = vpop.f32.mrb[0].mxu0
  %v918 = vadd.f32 0.0, %v917
  %v919 = vpop.f32.mrb[0].mxu0
  %920 = vmatprep.mubr.f32.mxu0 0.0
  %921 = vmatmul.mubr.f32.gmra.mrb[0].mxu0 %v623
  %v922 = vpop.f32.mrb[0].mxu0
  %v923 = vadd.f32 0.0, %v922
  %v924 = vpop.f32.mrb[0].mxu0
  %925 = vmatprep.mubr.f32.mxu0 0.0
  %926 = vmatmul.mubr.f32.gmra.mrb[0].mxu0 %v624
  %v927 = vpop.f32.mrb[0].mxu0
  %v928 = vadd.f32 0.0, %v927
  %v929 = vpop.f32.mrb[0].mxu0
  %930 = vdwg.mxu0
  %v931 = vadd.f32 %v811, %v913
  %v932 = vadd.f32 %v816, %v918
  %v933 = vadd.f32 %v821, %v923
  %v934 = vadd.f32 %v826, %v928
  %v935 = vlaneseq
  %v936 = vshrl.u32 %v935, 7
  %v937 = vsub.s32 0, %v936
  %v938 = vrot.slane %v598, %v937
  %v939 = vadd.f32 %v931, %v938
  %v940 = vadd.f32 %v932, %v938
  %v941 = vadd.f32 %v933, %v938
  %v942 = vadd.f32 %v934, %v938
  %v943 = vmul.f32 %v939, 0.01
  %v944 = vmul.f32 %v940, 0.01
  %v945 = vmul.f32 %v941, 0.01
  %v946 = vmul.f32 %v942, 0.01
  %v947 = vmax.f32 %v939, %v943
  %v948 = vmax.f32 %v940, %v944
  %v949 = vmax.f32 %v941, %v945
  %v950 = vmax.f32 %v942, %v946
  %v951 = vadd.f32 %v947, %v948
  %v952 = vadd.f32 %v951, %v949
  %v953 = vadd.f32 %v952, %v950
  %v954 = vrot.slane %v953, 4
  %v955 = vadd.f32 %v953, %v954
  %v956 = vrot.slane %v955, 2
  %v957 = vadd.f32 %v955, %v956
  %v958 = vrot.slane %v957, 1
  %v959 = vadd.f32 %v957, %v958
  %960 = vmatprep.subr.mxu0 0.0
  %961 = vmatpush1.msra.mxu0 %v24
  %962 = vmatprep.subr.mxu0 0.0
  %963 = vmatpush1.msra.mxu0 %v25
  %964 = vmatprep.subr.mxu0 0.0
  %965 = vmatpush1.msra.mxu0 %v26
  %966 = vmatprep.subr.mxu0 0.0
  %967 = vmatpush1.msra.mxu0 %v27
  %968 = vmatprep.subr.mxu0 0.0
  %969 = vmatpush1.msra.mxu0 %v28
  %970 = vmatprep.subr.mxu0 0.0
  %971 = vmatpush1.msra.mxu0 %v29
  %972 = vmatprep.subr.mxu0 0.0
  %973 = vmatpush1.msra.mxu0 %v30
  %974 = vmatprep.subr.mxu0 0.0
  %975 = vmatpush1.msra.mxu0 %v31
  %976 = vmatprep.subr.mxu0 0.0
  %977 = vmatpush1.msra.mxu0 %v32
  %978 = vmatprep.subr.mxu0 0.0
  %979 = vmatpush1.msra.mxu0 %v33
  %980 = vmatprep.subr.mxu0 0.0
  %981 = vmatpush1.msra.mxu0 %v34
  %982 = vmatprep.subr.mxu0 0.0
  %983 = vmatpush1.msra.mxu0 %v35
  %984 = vmatprep.subr.mxu0 0.0
  %985 = vmatpush1.msra.mxu0 %v36
  %986 = vmatprep.subr.mxu0 0.0
  %987 = vmatpush1.msra.mxu0 %v37
  %988 = vmatprep.subr.mxu0 0.0
  %989 = vmatpush1.msra.mxu0 %v38
  %990 = vmatprep.subr.mxu0 0.0
  %991 = vmatpush1.msra.mxu0 %v39
  %992 = vmatprep.subr.mxu0 0.0
  %993 = vmatpush1.msra.mxu0 0.0
  %994 = vmatprep.subr.mxu0 0.0
  %995 = vmatpush1.msra.mxu0 0.0
  %996 = vmatprep.subr.mxu0 0.0
  %997 = vmatpush1.msra.mxu0 0.0
  %998 = vmatprep.subr.mxu0 0.0
  %999 = vmatpush1.msra.mxu0 0.0
  %1000 = vmatprep.subr.mxu0 0.0
  %1001 = vmatpush1.msra.mxu0 0.0
  %1002 = vmatprep.subr.mxu0 0.0
  %1003 = vmatpush1.msra.mxu0 0.0
  %1004 = vmatprep.subr.mxu0 0.0
  %1005 = vmatpush1.msra.mxu0 0.0
  %1006 = vmatprep.subr.mxu0 0.0
  %1007 = vmatpush1.msra.mxu0 0.0
  %1008 = vmatprep.subr.mxu0 0.0
  %1009 = vmatpush1.msra.mxu0 0.0
  %1010 = vmatprep.subr.mxu0 0.0
  %1011 = vmatpush1.msra.mxu0 0.0
  %1012 = vmatprep.subr.mxu0 0.0
  %1013 = vmatpush1.msra.mxu0 0.0
  %1014 = vmatprep.subr.mxu0 0.0
  %1015 = vmatpush1.msra.mxu0 0.0
  %1016 = vmatprep.subr.mxu0 0.0
  %1017 = vmatpush1.msra.mxu0 0.0
  %1018 = vmatprep.subr.mxu0 0.0
  %1019 = vmatpush1.msra.mxu0 0.0
  %1020 = vmatprep.subr.mxu0 0.0
  %1021 = vmatpush1.msra.mxu0 0.0
  %1022 = vmatprep.subr.mxu0 0.0
  %1023 = vmatpush1.msra.mxu0 0.0
  %1024 = vmatprep.mubr.f32.mxu0 0.0
  %1025 = vmatmul.mubr.f32.gmra.mrb[0].mxu0 %v959
  %v1026 = vpop.f32.mrb[0].mxu0
  %v1027 = vadd.f32 0.0, %v1026
  %v1028 = vpop.f32.mrb[0].mxu0
  %1029 = vdwg.mxu0
  %v1030 = vmul.f32 %v1027, 0.001953125
  %v1031 = vlaneseq
  %v1032 = vshrl.u32 %v1031, 7
  %v1033 = vsub.s32 0, %v1032
  %v1034 = vrot.slane %v1030, %v1033
  %v1035 = vsub.f32 %v947, %v1034
  %v1036 = vsub.f32 %v948, %v1034
  %v1037 = vsub.f32 %v949, %v1034
  %v1038 = vsub.f32 %v950, %v1034
  %v1039 = vmul.f32 %v1035, %v1035
  %v1040 = vmul.f32 %v1036, %v1036
  %v1041 = vmul.f32 %v1037, %v1037
  %v1042 = vmul.f32 %v1038, %v1038
  %v1043 = vadd.f32 %v1039, %v1040
  %v1044 = vadd.f32 %v1043, %v1041
  %v1045 = vadd.f32 %v1044, %v1042
  %v1046 = vrot.slane %v1045, 4
  %v1047 = vadd.f32 %v1045, %v1046
  %v1048 = vrot.slane %v1047, 2
  %v1049 = vadd.f32 %v1047, %v1048
  %v1050 = vrot.slane %v1049, 1
  %v1051 = vadd.f32 %v1049, %v1050
  %1052 = vmatprep.subr.mxu0 0.0
  %1053 = vmatpush1.msra.mxu0 %v24
  %1054 = vmatprep.subr.mxu0 0.0
  %1055 = vmatpush1.msra.mxu0 %v25
  %1056 = vmatprep.subr.mxu0 0.0
  %1057 = vmatpush1.msra.mxu0 %v26
  %1058 = vmatprep.subr.mxu0 0.0
  %1059 = vmatpush1.msra.mxu0 %v27
  %1060 = vmatprep.subr.mxu0 0.0
  %1061 = vmatpush1.msra.mxu0 %v28
  %1062 = vmatprep.subr.mxu0 0.0
  %1063 = vmatpush1.msra.mxu0 %v29
  %1064 = vmatprep.subr.mxu0 0.0
  %1065 = vmatpush1.msra.mxu0 %v30
  %1066 = vmatprep.subr.mxu0 0.0
  %1067 = vmatpush1.msra.mxu0 %v31
  %1068 = vmatprep.subr.mxu0 0.0
  %1069 = vmatpush1.msra.mxu0 %v32
  %1070 = vmatprep.subr.mxu0 0.0
  %1071 = vmatpush1.msra.mxu0 %v33
  %1072 = vmatprep.subr.mxu0 0.0
  %1073 = vmatpush1.msra.mxu0 %v34
  %1074 = vmatprep.subr.mxu0 0.0
  %1075 = vmatpush1.msra.mxu0 %v35
  %1076 = vmatprep.subr.mxu0 0.0
  %1077 = vmatpush1.msra.mxu0 %v36
  %1078 = vmatprep.subr.mxu0 0.0
  %1079 = vmatpush1.msra.mxu0 %v37
  %1080 = vmatprep.subr.mxu0 0.0
  %1081 = vmatpush1.msra.mxu0 %v38
  %1082 = vmatprep.subr.mxu0 0.0
  %1083 = vmatpush1.msra.mxu0 %v39
  %1084 = vmatprep.subr.mxu0 0.0
  %1085 = vmatpush1.msra.mxu0 0.0
  %1086 = vmatprep.subr.mxu0 0.0
  %1087 = vmatpush1.msra.mxu0 0.0
  %1088 = vmatprep.subr.mxu0 0.0
  %1089 = vmatpush1.msra.mxu0 0.0
  %1090 = vmatprep.subr.mxu0 0.0
  %1091 = vmatpush1.msra.mxu0 0.0
  %1092 = vmatprep.subr.mxu0 0.0
  %1093 = vmatpush1.msra.mxu0 0.0
  %1094 = vmatprep.subr.mxu0 0.0
  %1095 = vmatpush1.msra.mxu0 0.0
  %1096 = vmatprep.subr.mxu0 0.0
  %1097 = vmatpush1.msra.mxu0 0.0
  %1098 = vmatprep.subr.mxu0 0.0
  %1099 = vmatpush1.msra.mxu0 0.0
  %1100 = vmatprep.subr.mxu0 0.0
  %1101 = vmatpush1.msra.mxu0 0.0
  %1102 = vmatprep.subr.mxu0 0.0
  %1103 = vmatpush1.msra.mxu0 0.0
  %1104 = vmatprep.subr.mxu0 0.0
  %1105 = vmatpush1.msra.mxu0 0.0
  %1106 = vmatprep.subr.mxu0 0.0
  %1107 = vmatpush1.msra.mxu0 0.0
  %1108 = vmatprep.subr.mxu0 0.0
  %1109 = vmatpush1.msra.mxu0 0.0
  %1110 = vmatprep.subr.mxu0 0.0
  %1111 = vmatpush1.msra.mxu0 0.0
  %1112 = vmatprep.subr.mxu0 0.0
  %1113 = vmatpush1.msra.mxu0 0.0
  %1114 = vmatprep.subr.mxu0 0.0
  %1115 = vmatpush1.msra.mxu0 0.0
  %1116 = vmatprep.mubr.f32.mxu0 0.0
  %1117 = vmatmul.mubr.f32.gmra.mrb[0].mxu0 %v1051
  %v1118 = vpop.f32.mrb[0].mxu0
  %v1119 = vadd.f32 0.0, %v1118
  %v1120 = vpop.f32.mrb[0].mxu0
  %1121 = vdwg.mxu0
  %v1122 = vmul.f32 %v1119, 0.001953125
  %v1123 = vadd.f32 %v1122, 1e-05
  %v1124 = vrsqrt.pop %v1123
  %v1125 = vmul.f32 %v599, %v1124
  %v1126 = vmul.f32 %v1030, %v1125
  %v1127 = vsub.f32 %v600, %v1126
  %v1128 = vlaneseq
  %v1129 = vshrl.u32 %v1128, 7
  %v1130 = vsub.s32 0, %v1129
  %v1131 = vrot.slane %v1125, %v1130
  %v1132 = vmul.f32 %v947, %v1131
  %v1133 = vmul.f32 %v948, %v1131
  %v1134 = vmul.f32 %v949, %v1131
  %v1135 = vmul.f32 %v950, %v1131
  %v1136 = vlaneseq
  %v1137 = vshrl.u32 %v1136, 7
  %v1138 = vsub.s32 0, %v1137
  %v1139 = vrot.slane %v1127, %v1138
  %v1140 = vadd.f32 %v1132, %v1139
  %v1141 = vadd.f32 %v1133, %v1139
  %v1142 = vadd.f32 %v1134, %v1139
  %v1143 = vadd.f32 %v1135, %v1139
  %v1144 = vld [vmem:[%s2 + $0x6] sm:$0x1]
  %v1145 = vld [vmem:[%s2 + $0x7] sm:$0x1]
  %v1146 = vld [vmem:[%s2 + $0x8] sm:$0x1]
  %v1147 = vrot.slane %v1140, 7
  %v1148 = vrot.slane %v1141, 7
  %v1149 = vrot.slane %v1142, 7
  %v1150 = vrot.slane %v1143, 7
  %v1151 = vsel %vm58, %v1149, %v1150
  %v1152 = vsel %vm58, %v1148, %v1149
  %v1153 = vsel %vm58, %v1147, %v1148
  %v1154 = vsel %vm58, %v1150, %v1147
  %v1155 = vmul.f32 %v1154, %v40
  %v1156 = vmul.f32 %v1153, %v41
  %v1157 = vmul.f32 %v1152, %v42
  %v1158 = vmul.f32 %v1151, %v43
  %v1159 = vrot.slane %v1140, 1
  %v1160 = vrot.slane %v1141, 1
  %v1161 = vrot.slane %v1142, 1
  %v1162 = vrot.slane %v1143, 1
  %v1163 = vsel %vm71, %v1161, %v1162
  %v1164 = vsel %vm71, %v1160, %v1161
  %v1165 = vsel %vm71, %v1159, %v1160
  %v1166 = vsel %vm71, %v1162, %v1159
  %v1167 = vmul.f32 %v1165, %v45
  %v1168 = vmul.f32 %v1164, %v46
  %v1169 = vmul.f32 %v1163, %v47
  %v1170 = vmul.f32 %v1166, %v48
  %s1171 = scalar_lea.vmem %s1, 768
  %v1172 = vld [vmem:[%s1171] sm:$0xff]
  %v1173 = vld [vmem:[%s1171 + $0x8] sm:$0xff]
  %v1174 = vld [vmem:[%s1171 + $0x10] sm:$0xff]
  %v1175 = vld [vmem:[%s1171 + $0x18] sm:$0xff]
  %v1176 = vld [vmem:[%s1171 + $0x20] sm:$0xff]
  %v1177 = vld [vmem:[%s1171 + $0x28] sm:$0xff]
  %v1178 = vld [vmem:[%s1171 + $0x30] sm:$0xff]
  %v1179 = vld [vmem:[%s1171 + $0x38] sm:$0xff]
  %v1180 = vld [vmem:[%s1171 + $0x40] sm:$0xff]
  %v1181 = vld [vmem:[%s1171 + $0x48] sm:$0xff]
  %v1182 = vld [vmem:[%s1171 + $0x50] sm:$0xff]
  %v1183 = vld [vmem:[%s1171 + $0x58] sm:$0xff]
  %v1184 = vld [vmem:[%s1171 + $0x60] sm:$0xff]
  %v1185 = vld [vmem:[%s1171 + $0x68] sm:$0xff]
  %v1186 = vld [vmem:[%s1171 + $0x70] sm:$0xff]
  %v1187 = vld [vmem:[%s1171 + $0x78] sm:$0xff]
  %s1188 = scalar_lea.vmem %s1, 896
  %v1189 = vld [vmem:[%s1188] sm:$0xff]
  %v1190 = vld [vmem:[%s1188 + $0x8] sm:$0xff]
  %v1191 = vld [vmem:[%s1188 + $0x10] sm:$0xff]
  %v1192 = vld [vmem:[%s1188 + $0x18] sm:$0xff]
  %v1193 = vld [vmem:[%s1188 + $0x20] sm:$0xff]
  %v1194 = vld [vmem:[%s1188 + $0x28] sm:$0xff]
  %v1195 = vld [vmem:[%s1188 + $0x30] sm:$0xff]
  %v1196 = vld [vmem:[%s1188 + $0x38] sm:$0xff]
  %v1197 = vld [vmem:[%s1188 + $0x40] sm:$0xff]
  %v1198 = vld [vmem:[%s1188 + $0x48] sm:$0xff]
  %v1199 = vld [vmem:[%s1188 + $0x50] sm:$0xff]
  %v1200 = vld [vmem:[%s1188 + $0x58] sm:$0xff]
  %v1201 = vld [vmem:[%s1188 + $0x60] sm:$0xff]
  %v1202 = vld [vmem:[%s1188 + $0x68] sm:$0xff]
  %v1203 = vld [vmem:[%s1188 + $0x70] sm:$0xff]
  %v1204 = vld [vmem:[%s1188 + $0x78] sm:$0xff]
  %1205 = vmatprep.subr.mxu0 0.0
  %1206 = vmatpush1.msra.mxu0 %v1189
  %1207 = vmatprep.subr.mxu0 0.0
  %1208 = vmatpush1.msra.mxu0 %v1190
  %1209 = vmatprep.subr.mxu0 0.0
  %1210 = vmatpush1.msra.mxu0 %v1191
  %1211 = vmatprep.subr.mxu0 0.0
  %1212 = vmatpush1.msra.mxu0 %v1192
  %1213 = vmatprep.subr.mxu0 0.0
  %1214 = vmatpush1.msra.mxu0 %v1193
  %1215 = vmatprep.subr.mxu0 0.0
  %1216 = vmatpush1.msra.mxu0 %v1194
  %1217 = vmatprep.subr.mxu0 0.0
  %1218 = vmatpush1.msra.mxu0 %v1195
  %1219 = vmatprep.subr.mxu0 0.0
  %1220 = vmatpush1.msra.mxu0 %v1196
  %1221 = vmatprep.subr.mxu0 0.0
  %1222 = vmatpush1.msra.mxu0 %v1197
  %1223 = vmatprep.subr.mxu0 0.0
  %1224 = vmatpush1.msra.mxu0 %v1198
  %1225 = vmatprep.subr.mxu0 0.0
  %1226 = vmatpush1.msra.mxu0 %v1199
  %1227 = vmatprep.subr.mxu0 0.0
  %1228 = vmatpush1.msra.mxu0 %v1200
  %1229 = vmatprep.subr.mxu0 0.0
  %1230 = vmatpush1.msra.mxu0 %v1201
  %1231 = vmatprep.subr.mxu0 0.0
  %1232 = vmatpush1.msra.mxu0 %v1202
  %1233 = vmatprep.subr.mxu0 0.0
  %1234 = vmatpush1.msra.mxu0 %v1203
  %1235 = vmatprep.subr.mxu0 0.0
  %1236 = vmatpush1.msra.mxu0 %v1204
  %1237 = vmatprep.subr.mxu0 0.0
  %1238 = vmatpush1.msra.mxu0 0.0
  %1239 = vmatprep.subr.mxu0 0.0
  %1240 = vmatpush1.msra.mxu0 0.0
  %1241 = vmatprep.subr.mxu0 0.0
  %1242 = vmatpush1.msra.mxu0 0.0
  %1243 = vmatprep.subr.mxu0 0.0
  %1244 = vmatpush1.msra.mxu0 0.0
  %1245 = vmatprep.subr.mxu0 0.0
  %1246 = vmatpush1.msra.mxu0 0.0
  %1247 = vmatprep.subr.mxu0 0.0
  %1248 = vmatpush1.msra.mxu0 0.0
  %1249 = vmatprep.subr.mxu0 0.0
  %1250 = vmatpush1.msra.mxu0 0.0
  %1251 = vmatprep.subr.mxu0 0.0
  %1252 = vmatpush1.msra.mxu0 0.0
  %1253 = vmatprep.subr.mxu0 0.0
  %1254 = vmatpush1.msra.mxu0 0.0
  %1255 = vmatprep.subr.mxu0 0.0
  %1256 = vmatpush1.msra.mxu0 0.0
  %1257 = vmatprep.subr.mxu0 0.0
  %1258 = vmatpush1.msra.mxu0 0.0
  %1259 = vmatprep.subr.mxu0 0.0
  %1260 = vmatpush1.msra.mxu0 0.0
  %1261 = vmatprep.subr.mxu0 0.0
  %1262 = vmatpush1.msra.mxu0 0.0
  %1263 = vmatprep.subr.mxu0 0.0
  %1264 = vmatpush1.msra.mxu0 0.0
  %1265 = vmatprep.subr.mxu0 0.0
  %1266 = vmatpush1.msra.mxu0 0.0
  %1267 = vmatprep.subr.mxu0 0.0
  %1268 = vmatpush1.msra.mxu0 0.0
  %1269 = vmatprep.mubr.f32.mxu0 0.0
  %1270 = vmatmul.mubr.f32.gmra.mrb[0].mxu0 %v1140
  %v1271 = vpop.f32.mrb[0].mxu0
  %v1272 = vadd.f32 0.0, %v1271
  %v1273 = vpop.f32.mrb[0].mxu0
  %1274 = vmatprep.mubr.f32.mxu0 0.0
  %1275 = vmatmul.mubr.f32.gmra.mrb[0].mxu0 %v1141
  %v1276 = vpop.f32.mrb[0].mxu0
  %v1277 = vadd.f32 0.0, %v1276
  %v1278 = vpop.f32.mrb[0].mxu0
  %1279 = vmatprep.mubr.f32.mxu0 0.0
  %1280 = vmatmul.mubr.f32.gmra.mrb[0].mxu0 %v1142
  %v1281 = vpop.f32.mrb[0].mxu0
  %v1282 = vadd.f32 0.0, %v1281
  %v1283 = vpop.f32.mrb[0].mxu0
  %1284 = vmatprep.mubr.f32.mxu0 0.0
  %1285 = vmatmul.mubr.f32.gmra.mrb[0].mxu0 %v1143
  %v1286 = vpop.f32.mrb[0].mxu0
  %v1287 = vadd.f32 0.0, %v1286
  %v1288 = vpop.f32.mrb[0].mxu0
  %1289 = vdwg.mxu0
  %1290 = vmatprep.subr.mxu0 0.0
  %1291 = vmatpush1.msra.mxu0 %v1172
  %1292 = vmatprep.subr.mxu0 0.0
  %1293 = vmatpush1.msra.mxu0 %v1173
  %1294 = vmatprep.subr.mxu0 0.0
  %1295 = vmatpush1.msra.mxu0 %v1174
  %1296 = vmatprep.subr.mxu0 0.0
  %1297 = vmatpush1.msra.mxu0 %v1175
  %1298 = vmatprep.subr.mxu0 0.0
  %1299 = vmatpush1.msra.mxu0 %v1176
  %1300 = vmatprep.subr.mxu0 0.0
  %1301 = vmatpush1.msra.mxu0 %v1177
  %1302 = vmatprep.subr.mxu0 0.0
  %1303 = vmatpush1.msra.mxu0 %v1178
  %1304 = vmatprep.subr.mxu0 0.0
  %1305 = vmatpush1.msra.mxu0 %v1179
  %1306 = vmatprep.subr.mxu0 0.0
  %1307 = vmatpush1.msra.mxu0 %v1180
  %1308 = vmatprep.subr.mxu0 0.0
  %1309 = vmatpush1.msra.mxu0 %v1181
  %1310 = vmatprep.subr.mxu0 0.0
  %1311 = vmatpush1.msra.mxu0 %v1182
  %1312 = vmatprep.subr.mxu0 0.0
  %1313 = vmatpush1.msra.mxu0 %v1183
  %1314 = vmatprep.subr.mxu0 0.0
  %1315 = vmatpush1.msra.mxu0 %v1184
  %1316 = vmatprep.subr.mxu0 0.0
  %1317 = vmatpush1.msra.mxu0 %v1185
  %1318 = vmatprep.subr.mxu0 0.0
  %1319 = vmatpush1.msra.mxu0 %v1186
  %1320 = vmatprep.subr.mxu0 0.0
  %1321 = vmatpush1.msra.mxu0 %v1187
  %1322 = vmatprep.subr.mxu0 0.0
  %1323 = vmatpush1.msra.mxu0 0.0
  %1324 = vmatprep.subr.mxu0 0.0
  %1325 = vmatpush1.msra.mxu0 0.0
  %1326 = vmatprep.subr.mxu0 0.0
  %1327 = vmatpush1.msra.mxu0 0.0
  %1328 = vmatprep.subr.mxu0 0.0
  %1329 = vmatpush1.msra.mxu0 0.0
  %1330 = vmatprep.subr.mxu0 0.0
  %1331 = vmatpush1.msra.mxu0 0.0
  %1332 = vmatprep.subr.mxu0 0.0
  %1333 = vmatpush1.msra.mxu0 0.0
  %1334 = vmatprep.subr.mxu0 0.0
  %1335 = vmatpush1.msra.mxu0 0.0
  %1336 = vmatprep.subr.mxu0 0.0
  %1337 = vmatpush1.msra.mxu0 0.0
  %1338 = vmatprep.subr.mxu0 0.0
  %1339 = vmatpush1.msra.mxu0 0.0
  %1340 = vmatprep.subr.mxu0 0.0
  %1341 = vmatpush1.msra.mxu0 0.0
  %1342 = vmatprep.subr.mxu0 0.0
  %1343 = vmatpush1.msra.mxu0 0.0
  %1344 = vmatprep.subr.mxu0 0.0
  %1345 = vmatpush1.msra.mxu0 0.0
  %1346 = vmatprep.subr.mxu0 0.0
  %1347 = vmatpush1.msra.mxu0 0.0
  %1348 = vmatprep.subr.mxu0 0.0
  %1349 = vmatpush1.msra.mxu0 0.0
  %1350 = vmatprep.subr.mxu0 0.0
  %1351 = vmatpush1.msra.mxu0 0.0
  %1352 = vmatprep.subr.mxu0 0.0
  %1353 = vmatpush1.msra.mxu0 0.0
  %1354 = vmatprep.mubr.f32.mxu0 0.0
  %1355 = vmatmul.mubr.f32.gmra.mrb[0].mxu0 %v1155
  %v1356 = vpop.f32.mrb[0].mxu0
  %v1357 = vadd.f32 %v1272, %v1356
  %v1358 = vpop.f32.mrb[0].mxu0
  %1359 = vmatprep.mubr.f32.mxu0 0.0
  %1360 = vmatmul.mubr.f32.gmra.mrb[0].mxu0 %v1156
  %v1361 = vpop.f32.mrb[0].mxu0
  %v1362 = vadd.f32 %v1277, %v1361
  %v1363 = vpop.f32.mrb[0].mxu0
  %1364 = vmatprep.mubr.f32.mxu0 0.0
  %1365 = vmatmul.mubr.f32.gmra.mrb[0].mxu0 %v1157
  %v1366 = vpop.f32.mrb[0].mxu0
  %v1367 = vadd.f32 %v1282, %v1366
  %v1368 = vpop.f32.mrb[0].mxu0
  %1369 = vmatprep.mubr.f32.mxu0 0.0
  %1370 = vmatmul.mubr.f32.gmra.mrb[0].mxu0 %v1158
  %v1371 = vpop.f32.mrb[0].mxu0
  %v1372 = vadd.f32 %v1287, %v1371
  %v1373 = vpop.f32.mrb[0].mxu0
  %1374 = vdwg.mxu0
  %s1375 = scalar_lea.vmem %s1, 1024
  %v1376 = vld [vmem:[%s1375] sm:$0xff]
  %v1377 = vld [vmem:[%s1375 + $0x8] sm:$0xff]
  %v1378 = vld [vmem:[%s1375 + $0x10] sm:$0xff]
  %v1379 = vld [vmem:[%s1375 + $0x18] sm:$0xff]
  %v1380 = vld [vmem:[%s1375 + $0x20] sm:$0xff]
  %v1381 = vld [vmem:[%s1375 + $0x28] sm:$0xff]
  %v1382 = vld [vmem:[%s1375 + $0x30] sm:$0xff]
  %v1383 = vld [vmem:[%s1375 + $0x38] sm:$0xff]
  %v1384 = vld [vmem:[%s1375 + $0x40] sm:$0xff]
  %v1385 = vld [vmem:[%s1375 + $0x48] sm:$0xff]
  %v1386 = vld [vmem:[%s1375 + $0x50] sm:$0xff]
  %v1387 = vld [vmem:[%s1375 + $0x58] sm:$0xff]
  %v1388 = vld [vmem:[%s1375 + $0x60] sm:$0xff]
  %v1389 = vld [vmem:[%s1375 + $0x68] sm:$0xff]
  %v1390 = vld [vmem:[%s1375 + $0x70] sm:$0xff]
  %v1391 = vld [vmem:[%s1375 + $0x78] sm:$0xff]
  %1392 = vmatprep.subr.mxu0 0.0
  %1393 = vmatpush1.msra.mxu0 %v1376
  %1394 = vmatprep.subr.mxu0 0.0
  %1395 = vmatpush1.msra.mxu0 %v1377
  %1396 = vmatprep.subr.mxu0 0.0
  %1397 = vmatpush1.msra.mxu0 %v1378
  %1398 = vmatprep.subr.mxu0 0.0
  %1399 = vmatpush1.msra.mxu0 %v1379
  %1400 = vmatprep.subr.mxu0 0.0
  %1401 = vmatpush1.msra.mxu0 %v1380
  %1402 = vmatprep.subr.mxu0 0.0
  %1403 = vmatpush1.msra.mxu0 %v1381
  %1404 = vmatprep.subr.mxu0 0.0
  %1405 = vmatpush1.msra.mxu0 %v1382
  %1406 = vmatprep.subr.mxu0 0.0
  %1407 = vmatpush1.msra.mxu0 %v1383
  %1408 = vmatprep.subr.mxu0 0.0
  %1409 = vmatpush1.msra.mxu0 %v1384
  %1410 = vmatprep.subr.mxu0 0.0
  %1411 = vmatpush1.msra.mxu0 %v1385
  %1412 = vmatprep.subr.mxu0 0.0
  %1413 = vmatpush1.msra.mxu0 %v1386
  %1414 = vmatprep.subr.mxu0 0.0
  %1415 = vmatpush1.msra.mxu0 %v1387
  %1416 = vmatprep.subr.mxu0 0.0
  %1417 = vmatpush1.msra.mxu0 %v1388
  %1418 = vmatprep.subr.mxu0 0.0
  %1419 = vmatpush1.msra.mxu0 %v1389
  %1420 = vmatprep.subr.mxu0 0.0
  %1421 = vmatpush1.msra.mxu0 %v1390
  %1422 = vmatprep.subr.mxu0 0.0
  %1423 = vmatpush1.msra.mxu0 %v1391
  %1424 = vmatprep.subr.mxu0 0.0
  %1425 = vmatpush1.msra.mxu0 0.0
  %1426 = vmatprep.subr.mxu0 0.0
  %1427 = vmatpush1.msra.mxu0 0.0
  %1428 = vmatprep.subr.mxu0 0.0
  %1429 = vmatpush1.msra.mxu0 0.0
  %1430 = vmatprep.subr.mxu0 0.0
  %1431 = vmatpush1.msra.mxu0 0.0
  %1432 = vmatprep.subr.mxu0 0.0
  %1433 = vmatpush1.msra.mxu0 0.0
  %1434 = vmatprep.subr.mxu0 0.0
  %1435 = vmatpush1.msra.mxu0 0.0
  %1436 = vmatprep.subr.mxu0 0.0
  %1437 = vmatpush1.msra.mxu0 0.0
  %1438 = vmatprep.subr.mxu0 0.0
  %1439 = vmatpush1.msra.mxu0 0.0
  %1440 = vmatprep.subr.mxu0 0.0
  %1441 = vmatpush1.msra.mxu0 0.0
  %1442 = vmatprep.subr.mxu0 0.0
  %1443 = vmatpush1.msra.mxu0 0.0
  %1444 = vmatprep.subr.mxu0 0.0
  %1445 = vmatpush1.msra.mxu0 0.0
  %1446 = vmatprep.subr.mxu0 0.0
  %1447 = vmatpush1.msra.mxu0 0.0
  %1448 = vmatprep.subr.mxu0 0.0
  %1449 = vmatpush1.msra.mxu0 0.0
  %1450 = vmatprep.subr.mxu0 0.0
  %1451 = vmatpush1.msra.mxu0 0.0
  %1452 = vmatprep.subr.mxu0 0.0
  %1453 = vmatpush1.msra.mxu0 0.0
  %1454 = vmatprep.subr.mxu0 0.0
  %1455 = vmatpush1.msra.mxu0 0.0
  %1456 = vmatprep.mubr.f32.mxu0 0.0
  %1457 = vmatmul.mubr.f32.gmra.mrb[0].mxu0 %v1167
  %v1458 = vpop.f32.mrb[0].mxu0
  %v1459 = vadd.f32 0.0, %v1458
  %v1460 = vpop.f32.mrb[0].mxu0
  %1461 = vmatprep.mubr.f32.mxu0 0.0
  %1462 = vmatmul.mubr.f32.gmra.mrb[0].mxu0 %v1168
  %v1463 = vpop.f32.mrb[0].mxu0
  %v1464 = vadd.f32 0.0, %v1463
  %v1465 = vpop.f32.mrb[0].mxu0
  %1466 = vmatprep.mubr.f32.mxu0 0.0
  %1467 = vmatmul.mubr.f32.gmra.mrb[0].mxu0 %v1169
  %v1468 = vpop.f32.mrb[0].mxu0
  %v1469 = vadd.f32 0.0, %v1468
  %v1470 = vpop.f32.mrb[0].mxu0
  %1471 = vmatprep.mubr.f32.mxu0 0.0
  %1472 = vmatmul.mubr.f32.gmra.mrb[0].mxu0 %v1170
  %v1473 = vpop.f32.mrb[0].mxu0
  %v1474 = vadd.f32 0.0, %v1473
  %v1475 = vpop.f32.mrb[0].mxu0
  %1476 = vdwg.mxu0
  %v1477 = vadd.f32 %v1357, %v1459
  %v1478 = vadd.f32 %v1362, %v1464
  %v1479 = vadd.f32 %v1367, %v1469
  %v1480 = vadd.f32 %v1372, %v1474
  %v1481 = vlaneseq
  %v1482 = vshrl.u32 %v1481, 7
  %v1483 = vsub.s32 0, %v1482
  %v1484 = vrot.slane %v1144, %v1483
  %v1485 = vadd.f32 %v1477, %v1484
  %v1486 = vadd.f32 %v1478, %v1484
  %v1487 = vadd.f32 %v1479, %v1484
  %v1488 = vadd.f32 %v1480, %v1484
  %v1489 = vmul.f32 %v1485, 0.01
  %v1490 = vmul.f32 %v1486, 0.01
  %v1491 = vmul.f32 %v1487, 0.01
  %v1492 = vmul.f32 %v1488, 0.01
  %v1493 = vmax.f32 %v1485, %v1489
  %v1494 = vmax.f32 %v1486, %v1490
  %v1495 = vmax.f32 %v1487, %v1491
  %v1496 = vmax.f32 %v1488, %v1492
  %v1497 = vadd.f32 %v1493, %v1494
  %v1498 = vadd.f32 %v1497, %v1495
  %v1499 = vadd.f32 %v1498, %v1496
  %v1500 = vrot.slane %v1499, 4
  %v1501 = vadd.f32 %v1499, %v1500
  %v1502 = vrot.slane %v1501, 2
  %v1503 = vadd.f32 %v1501, %v1502
  %v1504 = vrot.slane %v1503, 1
  %v1505 = vadd.f32 %v1503, %v1504
  %1506 = vmatprep.subr.mxu0 0.0
  %1507 = vmatpush1.msra.mxu0 %v24
  %1508 = vmatprep.subr.mxu0 0.0
  %1509 = vmatpush1.msra.mxu0 %v25
  %1510 = vmatprep.subr.mxu0 0.0
  %1511 = vmatpush1.msra.mxu0 %v26
  %1512 = vmatprep.subr.mxu0 0.0
  %1513 = vmatpush1.msra.mxu0 %v27
  %1514 = vmatprep.subr.mxu0 0.0
  %1515 = vmatpush1.msra.mxu0 %v28
  %1516 = vmatprep.subr.mxu0 0.0
  %1517 = vmatpush1.msra.mxu0 %v29
  %1518 = vmatprep.subr.mxu0 0.0
  %1519 = vmatpush1.msra.mxu0 %v30
  %1520 = vmatprep.subr.mxu0 0.0
  %1521 = vmatpush1.msra.mxu0 %v31
  %1522 = vmatprep.subr.mxu0 0.0
  %1523 = vmatpush1.msra.mxu0 %v32
  %1524 = vmatprep.subr.mxu0 0.0
  %1525 = vmatpush1.msra.mxu0 %v33
  %1526 = vmatprep.subr.mxu0 0.0
  %1527 = vmatpush1.msra.mxu0 %v34
  %1528 = vmatprep.subr.mxu0 0.0
  %1529 = vmatpush1.msra.mxu0 %v35
  %1530 = vmatprep.subr.mxu0 0.0
  %1531 = vmatpush1.msra.mxu0 %v36
  %1532 = vmatprep.subr.mxu0 0.0
  %1533 = vmatpush1.msra.mxu0 %v37
  %1534 = vmatprep.subr.mxu0 0.0
  %1535 = vmatpush1.msra.mxu0 %v38
  %1536 = vmatprep.subr.mxu0 0.0
  %1537 = vmatpush1.msra.mxu0 %v39
  %1538 = vmatprep.subr.mxu0 0.0
  %1539 = vmatpush1.msra.mxu0 0.0
  %1540 = vmatprep.subr.mxu0 0.0
  %1541 = vmatpush1.msra.mxu0 0.0
  %1542 = vmatprep.subr.mxu0 0.0
  %1543 = vmatpush1.msra.mxu0 0.0
  %1544 = vmatprep.subr.mxu0 0.0
  %1545 = vmatpush1.msra.mxu0 0.0
  %1546 = vmatprep.subr.mxu0 0.0
  %1547 = vmatpush1.msra.mxu0 0.0
  %1548 = vmatprep.subr.mxu0 0.0
  %1549 = vmatpush1.msra.mxu0 0.0
  %1550 = vmatprep.subr.mxu0 0.0
  %1551 = vmatpush1.msra.mxu0 0.0
  %1552 = vmatprep.subr.mxu0 0.0
  %1553 = vmatpush1.msra.mxu0 0.0
  %1554 = vmatprep.subr.mxu0 0.0
  %1555 = vmatpush1.msra.mxu0 0.0
  %1556 = vmatprep.subr.mxu0 0.0
  %1557 = vmatpush1.msra.mxu0 0.0
  %1558 = vmatprep.subr.mxu0 0.0
  %1559 = vmatpush1.msra.mxu0 0.0
  %1560 = vmatprep.subr.mxu0 0.0
  %1561 = vmatpush1.msra.mxu0 0.0
  %1562 = vmatprep.subr.mxu0 0.0
  %1563 = vmatpush1.msra.mxu0 0.0
  %1564 = vmatprep.subr.mxu0 0.0
  %1565 = vmatpush1.msra.mxu0 0.0
  %1566 = vmatprep.subr.mxu0 0.0
  %1567 = vmatpush1.msra.mxu0 0.0
  %1568 = vmatprep.subr.mxu0 0.0
  %1569 = vmatpush1.msra.mxu0 0.0
  %1570 = vmatprep.mubr.f32.mxu0 0.0
  %1571 = vmatmul.mubr.f32.gmra.mrb[0].mxu0 %v1505
  %v1572 = vpop.f32.mrb[0].mxu0
  %v1573 = vadd.f32 0.0, %v1572
  %v1574 = vpop.f32.mrb[0].mxu0
  %1575 = vdwg.mxu0
  %v1576 = vmul.f32 %v1573, 0.001953125
  %v1577 = vlaneseq
  %v1578 = vshrl.u32 %v1577, 7
  %v1579 = vsub.s32 0, %v1578
  %v1580 = vrot.slane %v1576, %v1579
  %v1581 = vsub.f32 %v1493, %v1580
  %v1582 = vsub.f32 %v1494, %v1580
  %v1583 = vsub.f32 %v1495, %v1580
  %v1584 = vsub.f32 %v1496, %v1580
  %v1585 = vmul.f32 %v1581, %v1581
  %v1586 = vmul.f32 %v1582, %v1582
  %v1587 = vmul.f32 %v1583, %v1583
  %v1588 = vmul.f32 %v1584, %v1584
  %v1589 = vadd.f32 %v1585, %v1586
  %v1590 = vadd.f32 %v1589, %v1587
  %v1591 = vadd.f32 %v1590, %v1588
  %v1592 = vrot.slane %v1591, 4
  %v1593 = vadd.f32 %v1591, %v1592
  %v1594 = vrot.slane %v1593, 2
  %v1595 = vadd.f32 %v1593, %v1594
  %v1596 = vrot.slane %v1595, 1
  %v1597 = vadd.f32 %v1595, %v1596
  %1598 = vmatprep.subr.mxu0 0.0
  %1599 = vmatpush1.msra.mxu0 %v24
  %1600 = vmatprep.subr.mxu0 0.0
  %1601 = vmatpush1.msra.mxu0 %v25
  %1602 = vmatprep.subr.mxu0 0.0
  %1603 = vmatpush1.msra.mxu0 %v26
  %1604 = vmatprep.subr.mxu0 0.0
  %1605 = vmatpush1.msra.mxu0 %v27
  %1606 = vmatprep.subr.mxu0 0.0
  %1607 = vmatpush1.msra.mxu0 %v28
  %1608 = vmatprep.subr.mxu0 0.0
  %1609 = vmatpush1.msra.mxu0 %v29
  %1610 = vmatprep.subr.mxu0 0.0
  %1611 = vmatpush1.msra.mxu0 %v30
  %1612 = vmatprep.subr.mxu0 0.0
  %1613 = vmatpush1.msra.mxu0 %v31
  %1614 = vmatprep.subr.mxu0 0.0
  %1615 = vmatpush1.msra.mxu0 %v32
  %1616 = vmatprep.subr.mxu0 0.0
  %1617 = vmatpush1.msra.mxu0 %v33
  %1618 = vmatprep.subr.mxu0 0.0
  %1619 = vmatpush1.msra.mxu0 %v34
  %1620 = vmatprep.subr.mxu0 0.0
  %1621 = vmatpush1.msra.mxu0 %v35
  %1622 = vmatprep.subr.mxu0 0.0
  %1623 = vmatpush1.msra.mxu0 %v36
  %1624 = vmatprep.subr.mxu0 0.0
  %1625 = vmatpush1.msra.mxu0 %v37
  %1626 = vmatprep.subr.mxu0 0.0
  %1627 = vmatpush1.msra.mxu0 %v38
  %1628 = vmatprep.subr.mxu0 0.0
  %1629 = vmatpush1.msra.mxu0 %v39
  %1630 = vmatprep.subr.mxu0 0.0
  %1631 = vmatpush1.msra.mxu0 0.0
  %1632 = vmatprep.subr.mxu0 0.0
  %1633 = vmatpush1.msra.mxu0 0.0
  %1634 = vmatprep.subr.mxu0 0.0
  %1635 = vmatpush1.msra.mxu0 0.0
  %1636 = vmatprep.subr.mxu0 0.0
  %1637 = vmatpush1.msra.mxu0 0.0
  %1638 = vmatprep.subr.mxu0 0.0
  %1639 = vmatpush1.msra.mxu0 0.0
  %1640 = vmatprep.subr.mxu0 0.0
  %1641 = vmatpush1.msra.mxu0 0.0
  %1642 = vmatprep.subr.mxu0 0.0
  %1643 = vmatpush1.msra.mxu0 0.0
  %1644 = vmatprep.subr.mxu0 0.0
  %1645 = vmatpush1.msra.mxu0 0.0
  %1646 = vmatprep.subr.mxu0 0.0
  %1647 = vmatpush1.msra.mxu0 0.0
  %1648 = vmatprep.subr.mxu0 0.0
  %1649 = vmatpush1.msra.mxu0 0.0
  %1650 = vmatprep.subr.mxu0 0.0
  %1651 = vmatpush1.msra.mxu0 0.0
  %1652 = vmatprep.subr.mxu0 0.0
  %1653 = vmatpush1.msra.mxu0 0.0
  %1654 = vmatprep.subr.mxu0 0.0
  %1655 = vmatpush1.msra.mxu0 0.0
  %1656 = vmatprep.subr.mxu0 0.0
  %1657 = vmatpush1.msra.mxu0 0.0
  %1658 = vmatprep.subr.mxu0 0.0
  %1659 = vmatpush1.msra.mxu0 0.0
  %1660 = vmatprep.subr.mxu0 0.0
  %1661 = vmatpush1.msra.mxu0 0.0
  %1662 = vmatprep.mubr.f32.mxu0 0.0
  %1663 = vmatmul.mubr.f32.gmra.mrb[0].mxu0 %v1597
  %v1664 = vpop.f32.mrb[0].mxu0
  %v1665 = vadd.f32 0.0, %v1664
  %v1666 = vpop.f32.mrb[0].mxu0
  %1667 = vdwg.mxu0
  %v1668 = vmul.f32 %v1665, 0.001953125
  %v1669 = vadd.f32 %v1668, 1e-05
  %v1670 = vrsqrt.pop %v1669
  %v1671 = vmul.f32 %v1145, %v1670
  %v1672 = vmul.f32 %v1576, %v1671
  %v1673 = vsub.f32 %v1146, %v1672
  %v1674 = vlaneseq
  %v1675 = vshrl.u32 %v1674, 7
  %v1676 = vsub.s32 0, %v1675
  %v1677 = vrot.slane %v1671, %v1676
  %v1678 = vmul.f32 %v1493, %v1677
  %v1679 = vmul.f32 %v1494, %v1677
  %v1680 = vmul.f32 %v1495, %v1677
  %v1681 = vmul.f32 %v1496, %v1677
  %v1682 = vlaneseq
  %v1683 = vshrl.u32 %v1682, 7
  %v1684 = vsub.s32 0, %v1683
  %v1685 = vrot.slane %v1673, %v1684
  %v1686 = vadd.f32 %v1678, %v1685
  %v1687 = vadd.f32 %v1679, %v1685
  %v1688 = vadd.f32 %v1680, %v1685
  %v1689 = vadd.f32 %v1681, %v1685
  %v1690 = vadd.f32 %v1686, %v20
  %v1691 = vadd.f32 %v1687, %v21
  %v1692 = vadd.f32 %v1688, %v22
  %v1693 = vadd.f32 %v1689, %v23
  %v1694 = vmax.f32 %v1690, 0.0
  %v1695 = vmax.f32 %v1691, 0.0
  %v1696 = vmax.f32 %v1692, 0.0
  %v1697 = vmax.f32 %v1693, 0.0
  %1698 = vst [vmem:[%s5] sm:$0xff] %v1694
  %1699 = vst [vmem:[%s5 + $0x8] sm:$0xff] %v1695
  %1700 = vst [vmem:[%s5 + $0x10] sm:$0xff] %v1696
  %1701 = vst [vmem:[%s5 + $0x18] sm:$0xff] %v1697
  // Predicated region
  $region22: #{residual_block.1} parent=0 // pred_check
    _
  $region23: #{residual_block.1} parent=0 // pred_check_branch
    %1703 = sbr.rel (0) target = $region25
  $region24: #{residual_block.1} parent=0 // pred_region
    _
  $region25: #{residual_block.1} parent=0 // pred_fallthru
    _
  // Predicated region
  $region26: #{residual_block.1} parent=0 // pred_check
    _
  $region27: #{residual_block.1} parent=0 // pred_check_branch
    %1705 = sbr.rel (0) target = $region29
  $region28: #{residual_block.1} parent=0 // pred_region
    _
  $region29: #{residual_block.1} parent=0 // pred_fallthru
    _

</llo_original>
